<compile_context>
chip_gen: v7x
topology: tpu7x:2x2x1
jax: 0.10.0
libtpu: 0.0.40
codegen_flags: <defaults>
</compile_context>

<pallas_src>
import functools

import jax
import jax.numpy as jnp
from jax.experimental import pallas as pl
from jax.experimental.pallas import tpu as pltpu


# ----------------------------- Pallas kernel --------------------------------

def _conv_fused_kernel(w_ref, b_ref, x_ref, o_ref, *, C, KH, KW, sh, sw, OH, OW):
    # w_ref: (KH*KW, Cout, C)          bf16 weight taps, resident (const index map)
    # b_ref: (Cout, 1)                 f32 bias column, resident
    # x_ref: (1, sh*sw*C, Hq, Wq)      bf16 space-to-depth image for this grid step
    # o_ref: (1, Cout, OH*OW)          f32 output for this image
    Cout = o_ref.shape[1]
    xb = x_ref[0]                                    # (sh*sw*C, Hq, Wq), one VMEM load
    acc = jnp.zeros((Cout, OH * OW), jnp.float32)
    for kh in range(KH):                             # 9 taps, fully unrolled
        dh, di = kh % sh, kh // sh
        for kw in range(KW):
            dw, dj = kw % sw, kw // sw
            p = dh * sw + dw                         # space-to-depth phase
            tap = xb[p * C:(p + 1) * C, di:di + OH, dj:dj + OW]   # (C, OH, OW)
            tap = tap.reshape(C, OH * OW)
            acc = acc + jnp.dot(w_ref[kh * KW + kw], tap,
                                preferred_element_type=jnp.float32)
    o_ref[0] = (acc + b_ref[...]).astype(o_ref.dtype)


# ----------------------------- Conv2d wrapper --------------------------------

def _conv2d_pallas_impl(x, weight, bias, *, stride, padding):
    """x: (N, C, H, W); weight: (Cout, C, KH, KW); bias: (Cout,).
    dilation=1, groups=1, zero padding. Returns f32 NCHW output."""
    N, C, H, W = x.shape
    Cout, Cin, KH, KW = weight.shape
    assert Cin == C  # groups == 1 only
    sh, sw = stride
    ph, pw = padding

    OH = (H + 2 * ph - KH) // sh + 1
    OW = (W + 2 * pw - KW) // sw + 1
    Hq = OH + (KH - 1) // sh          # rows needed per vertical phase
    Wq = OW + (KW - 1) // sw          # cols needed per horizontal phase
    Hp, Wp = sh * Hq, sw * Wq         # padded extent consumed by the kernel

    # --- glue (all inside jit): bf16 cast, zero-pad, space-to-depth.
    xb = x.astype(jnp.bfloat16)
    xb = jnp.pad(xb, ((0, 0), (0, 0),
                      (ph, max(Hp - H - ph, 0)),
                      (pw, max(Wp - W - pw, 0))))[:, :, :Hp, :Wp]
    # x_s2d[n, (dh*sw+dw)*C + c, i, j] == x_pad[n, c, sh*i + dh, sw*j + dw]
    x_s2d = (xb.reshape(N, C, Hq, sh, Wq, sw)
               .transpose(0, 3, 5, 1, 2, 4)
               .reshape(N, sh * sw * C, Hq, Wq))

    # w_taps[kh*KW + kw, co, c] == weight[co, c, kh, kw]
    w_taps = (weight.transpose(2, 3, 0, 1)
                    .reshape(KH * KW, Cout, C)
                    .astype(jnp.bfloat16))
    b_col = bias.reshape(Cout, 1).astype(jnp.float32)

    kernel = functools.partial(_conv_fused_kernel, C=C, KH=KH, KW=KW,
                               sh=sh, sw=sw, OH=OH, OW=OW)

    out = pl.pallas_call(
        kernel,
        out_shape=jax.ShapeDtypeStruct((N, Cout, OH * OW), jnp.float32),
        grid_spec=pltpu.PrefetchScalarGridSpec(
            num_scalar_prefetch=0,
            grid=(N,),
            in_specs=[
                pl.BlockSpec((KH * KW, Cout, C), lambda n: (0, 0, 0)),       # resident
                pl.BlockSpec((Cout, 1), lambda n: (0, 0)),                   # resident
                pl.BlockSpec((1, sh * sw * C, Hq, Wq), lambda n: (n, 0, 0, 0)),
            ],
            out_specs=pl.BlockSpec((1, Cout, OH * OW), lambda n: (n, 0, 0)),
        ),
        compiler_params=pltpu.CompilerParams(
            dimension_semantics=("parallel",)),
    )(w_taps, b_col, x_s2d)

    return out.reshape(N, Cout, OH, OW)   # NCHW, f32 — no output transpose needed


conv2d_pallas = jax.jit(_conv2d_pallas_impl, static_argnames=("stride", "padding"))


# --------------------------------- main --------------------------------------

if __name__ == "__main__":
    # Deterministic config (stands in for the random choices in Conv.__init__).
    N, C, H, W = 2, 4, 16, 16
    Cout, KH, KW = 8, 3, 3
    stride = (2, 2)
    padding = (1, 1)
    # dilation = (1, 1), groups = 1, bias = True, padding_mode = 'zeros'

    key = jax.random.PRNGKey(0)
    kx, kw_, kb = jax.random.split(key, 3)

    x = jax.random.normal(kx, (N, C, H, W), dtype=jnp.float32)

    # PyTorch-style default init: U(-1/sqrt(fan_in), 1/sqrt(fan_in))
    fan_in = C * KH * KW
    bound = 1.0 / float(fan_in) ** 0.5
    weight = jax.random.uniform(kw_, (Cout, C, KH, KW), jnp.float32, -bound, bound)
    bias = jax.random.uniform(kb, (Cout,), jnp.float32, -bound, bound)

    y = conv2d_pallas(x, weight, bias, stride=stride, padding=padding)
    y = jax.block_until_ready(y)

    # Pure-JAX f32 reference (matches nn.Conv2d semantics).
    y_ref = jax.lax.conv_general_dilated(
        x, weight, window_strides=stride,
        padding=[(padding[0], padding[0]), (padding[1], padding[1])],
        dimension_numbers=("NCHW", "OIHW", "NCHW"),
    ) + bias.reshape(1, Cout, 1, 1)

    assert y.shape == y_ref.shape, (y.shape, y_ref.shape)
    # bf16 MXU inputs with f32 accumulation -> relaxed tolerance vs f32 reference.
    err = float(jnp.max(jnp.abs(y - y_ref)))
    assert jnp.allclose(y, y_ref, atol=3e-2, rtol=3e-2), err

    print("KERNEL_OK")
</pallas_src>

<mosaic_0001>
module attributes {stable_mosaic.version = 11 : i64} {
  func.func @_conv_fused_kernel(%arg0: i32, %arg1: memref<9x8x4xbf16, #tpu.memory_space<vmem>>, %arg2: memref<8x1xf32, #tpu.memory_space<vmem>>, %arg3: memref<1x16x9x9xbf16, #tpu.memory_space<vmem>>, %arg4: memref<1x8x64xf32, #tpu.memory_space<vmem>>) attributes {dimension_semantics = [#tpu.dimension_semantics<parallel>], iteration_bounds = array<i64: 2>, scalar_prefetch = 0 : i64, scratch_operands = 0 : i64, tpu.core_type = #tpu.core_type<tc>, window_params = [{pipeline_mode = #tpu.pipeline_mode<synchronous>, transform_indices = @transform_0, window_bounds = array<i64: 9, 8, 4>}, {pipeline_mode = #tpu.pipeline_mode<synchronous>, transform_indices = @transform_1, window_bounds = array<i64: 8, 1>}, {transform_indices = @transform_2, window_bounds = array<i64: 1, 16, 9, 9>}, {transform_indices = @transform_3, window_bounds = array<i64: 1, 8, 64>}]} {
    %c0 = arith.constant 0 : index
    %c0_0 = arith.constant 0 : index
    %c0_1 = arith.constant 0 : index
    %c0_2 = arith.constant 0 : index
    %0 = vector.load %arg3[%c0, %c0_0, %c0_1, %c0_2] : memref<1x16x9x9xbf16, #tpu.memory_space<vmem>>, vector<1x16x9x9xbf16>
    %1 = vector.shape_cast %0 : vector<1x16x9x9xbf16> to vector<16x9x9xbf16>
    %cst = arith.constant 0.000000e+00 : f32
    %2 = vector.broadcast %cst : f32 to vector<8x64xf32>
    %3 = vector.extract_strided_slice %1 {offsets = [0, 0, 0], sizes = [4, 8, 8], strides = [1, 1, 1]} : vector<16x9x9xbf16> to vector<4x8x8xbf16>
    %4 = vector.shape_cast %3 : vector<4x8x8xbf16> to vector<4x64xbf16>
    %c0_3 = arith.constant 0 : index
    %c0_4 = arith.constant 0 : index
    %c0_5 = arith.constant 0 : index
    %5 = vector.load %arg1[%c0_3, %c0_4, %c0_5] : memref<9x8x4xbf16, #tpu.memory_space<vmem>>, vector<1x8x4xbf16>
    %6 = vector.shape_cast %5 : vector<1x8x4xbf16> to vector<8x4xbf16>
    %cst_6 = arith.constant dense<0.000000e+00> : vector<8x64xf32>
    %7 = tpu.matmul %6, %4, %cst_6 {dimension_numbers = #tpu.dot_dimension_numbers<[1], [0], [0], [1], [0, 0, 1, 1], [], []>} : vector<8x4xbf16>, vector<4x64xbf16>, vector<8x64xf32> -> vector<8x64xf32>
    %8 = arith.addf %2, %7 : vector<8x64xf32>
    %9 = vector.extract_strided_slice %1 {offsets = [4, 0, 0], sizes = [4, 8, 8], strides = [1, 1, 1]} : vector<16x9x9xbf16> to vector<4x8x8xbf16>
    %10 = vector.shape_cast %9 : vector<4x8x8xbf16> to vector<4x64xbf16>
    %c1 = arith.constant 1 : index
    %c0_7 = arith.constant 0 : index
    %c0_8 = arith.constant 0 : index
    %11 = vector.load %arg1[%c1, %c0_7, %c0_8] : memref<9x8x4xbf16, #tpu.memory_space<vmem>>, vector<1x8x4xbf16>
    %12 = vector.shape_cast %11 : vector<1x8x4xbf16> to vector<8x4xbf16>
    %cst_9 = arith.constant dense<0.000000e+00> : vector<8x64xf32>
    %13 = tpu.matmul %12, %10, %cst_9 {dimension_numbers = #tpu.dot_dimension_numbers<[1], [0], [0], [1], [0, 0, 1, 1], [], []>} : vector<8x4xbf16>, vector<4x64xbf16>, vector<8x64xf32> -> vector<8x64xf32>
    %14 = arith.addf %8, %13 : vector<8x64xf32>
    %15 = vector.extract_strided_slice %1 {offsets = [0, 0, 1], sizes = [4, 8, 8], strides = [1, 1, 1]} : vector<16x9x9xbf16> to vector<4x8x8xbf16>
    %16 = vector.shape_cast %15 : vector<4x8x8xbf16> to vector<4x64xbf16>
    %c2 = arith.constant 2 : index
    %c0_10 = arith.constant 0 : index
    %c0_11 = arith.constant 0 : index
    %17 = vector.load %arg1[%c2, %c0_10, %c0_11] : memref<9x8x4xbf16, #tpu.memory_space<vmem>>, vector<1x8x4xbf16>
    %18 = vector.shape_cast %17 : vector<1x8x4xbf16> to vector<8x4xbf16>
    %cst_12 = arith.constant dense<0.000000e+00> : vector<8x64xf32>
    %19 = tpu.matmul %18, %16, %cst_12 {dimension_numbers = #tpu.dot_dimension_numbers<[1], [0], [0], [1], [0, 0, 1, 1], [], []>} : vector<8x4xbf16>, vector<4x64xbf16>, vector<8x64xf32> -> vector<8x64xf32>
    %20 = arith.addf %14, %19 : vector<8x64xf32>
    %21 = vector.extract_strided_slice %1 {offsets = [8, 0, 0], sizes = [4, 8, 8], strides = [1, 1, 1]} : vector<16x9x9xbf16> to vector<4x8x8xbf16>
    %22 = vector.shape_cast %21 : vector<4x8x8xbf16> to vector<4x64xbf16>
    %c3 = arith.constant 3 : index
    %c0_13 = arith.constant 0 : index
    %c0_14 = arith.constant 0 : index
    %23 = vector.load %arg1[%c3, %c0_13, %c0_14] : memref<9x8x4xbf16, #tpu.memory_space<vmem>>, vector<1x8x4xbf16>
    %24 = vector.shape_cast %23 : vector<1x8x4xbf16> to vector<8x4xbf16>
    %cst_15 = arith.constant dense<0.000000e+00> : vector<8x64xf32>
    %25 = tpu.matmul %24, %22, %cst_15 {dimension_numbers = #tpu.dot_dimension_numbers<[1], [0], [0], [1], [0, 0, 1, 1], [], []>} : vector<8x4xbf16>, vector<4x64xbf16>, vector<8x64xf32> -> vector<8x64xf32>
    %26 = arith.addf %20, %25 : vector<8x64xf32>
    %27 = vector.extract_strided_slice %1 {offsets = [12, 0, 0], sizes = [4, 8, 8], strides = [1, 1, 1]} : vector<16x9x9xbf16> to vector<4x8x8xbf16>
    %28 = vector.shape_cast %27 : vector<4x8x8xbf16> to vector<4x64xbf16>
    %c4 = arith.constant 4 : index
    %c0_16 = arith.constant 0 : index
    %c0_17 = arith.constant 0 : index
    %29 = vector.load %arg1[%c4, %c0_16, %c0_17] : memref<9x8x4xbf16, #tpu.memory_space<vmem>>, vector<1x8x4xbf16>
    %30 = vector.shape_cast %29 : vector<1x8x4xbf16> to vector<8x4xbf16>
    %cst_18 = arith.constant dense<0.000000e+00> : vector<8x64xf32>
    %31 = tpu.matmul %30, %28, %cst_18 {dimension_numbers = #tpu.dot_dimension_numbers<[1], [0], [0], [1], [0, 0, 1, 1], [], []>} : vector<8x4xbf16>, vector<4x64xbf16>, vector<8x64xf32> -> vector<8x64xf32>
    %32 = arith.addf %26, %31 : vector<8x64xf32>
    %33 = vector.extract_strided_slice %1 {offsets = [8, 0, 1], sizes = [4, 8, 8], strides = [1, 1, 1]} : vector<16x9x9xbf16> to vector<4x8x8xbf16>
    %34 = vector.shape_cast %33 : vector<4x8x8xbf16> to vector<4x64xbf16>
    %c5 = arith.constant 5 : index
    %c0_19 = arith.constant 0 : index
    %c0_20 = arith.constant 0 : index
    %35 = vector.load %arg1[%c5, %c0_19, %c0_20] : memref<9x8x4xbf16, #tpu.memory_space<vmem>>, vector<1x8x4xbf16>
    %36 = vector.shape_cast %35 : vector<1x8x4xbf16> to vector<8x4xbf16>
    %cst_21 = arith.constant dense<0.000000e+00> : vector<8x64xf32>
    %37 = tpu.matmul %36, %34, %cst_21 {dimension_numbers = #tpu.dot_dimension_numbers<[1], [0], [0], [1], [0, 0, 1, 1], [], []>} : vector<8x4xbf16>, vector<4x64xbf16>, vector<8x64xf32> -> vector<8x64xf32>
    %38 = arith.addf %32, %37 : vector<8x64xf32>
    %39 = vector.extract_strided_slice %1 {offsets = [0, 1, 0], sizes = [4, 8, 8], strides = [1, 1, 1]} : vector<16x9x9xbf16> to vector<4x8x8xbf16>
    %40 = vector.shape_cast %39 : vector<4x8x8xbf16> to vector<4x64xbf16>
    %c6 = arith.constant 6 : index
    %c0_22 = arith.constant 0 : index
    %c0_23 = arith.constant 0 : index
    %41 = vector.load %arg1[%c6, %c0_22, %c0_23] : memref<9x8x4xbf16, #tpu.memory_space<vmem>>, vector<1x8x4xbf16>
    %42 = vector.shape_cast %41 : vector<1x8x4xbf16> to vector<8x4xbf16>
    %cst_24 = arith.constant dense<0.000000e+00> : vector<8x64xf32>
    %43 = tpu.matmul %42, %40, %cst_24 {dimension_numbers = #tpu.dot_dimension_numbers<[1], [0], [0], [1], [0, 0, 1, 1], [], []>} : vector<8x4xbf16>, vector<4x64xbf16>, vector<8x64xf32> -> vector<8x64xf32>
    %44 = arith.addf %38, %43 : vector<8x64xf32>
    %45 = vector.extract_strided_slice %1 {offsets = [4, 1, 0], sizes = [4, 8, 8], strides = [1, 1, 1]} : vector<16x9x9xbf16> to vector<4x8x8xbf16>
    %46 = vector.shape_cast %45 : vector<4x8x8xbf16> to vector<4x64xbf16>
    %c7 = arith.constant 7 : index
    %c0_25 = arith.constant 0 : index
    %c0_26 = arith.constant 0 : index
    %47 = vector.load %arg1[%c7, %c0_25, %c0_26] : memref<9x8x4xbf16, #tpu.memory_space<vmem>>, vector<1x8x4xbf16>
    %48 = vector.shape_cast %47 : vector<1x8x4xbf16> to vector<8x4xbf16>
    %cst_27 = arith.constant dense<0.000000e+00> : vector<8x64xf32>
    %49 = tpu.matmul %48, %46, %cst_27 {dimension_numbers = #tpu.dot_dimension_numbers<[1], [0], [0], [1], [0, 0, 1, 1], [], []>} : vector<8x4xbf16>, vector<4x64xbf16>, vector<8x64xf32> -> vector<8x64xf32>
    %50 = arith.addf %44, %49 : vector<8x64xf32>
    %51 = vector.extract_strided_slice %1 {offsets = [0, 1, 1], sizes = [4, 8, 8], strides = [1, 1, 1]} : vector<16x9x9xbf16> to vector<4x8x8xbf16>
    %52 = vector.shape_cast %51 : vector<4x8x8xbf16> to vector<4x64xbf16>
    %c8 = arith.constant 8 : index
    %c0_28 = arith.constant 0 : index
    %c0_29 = arith.constant 0 : index
    %53 = vector.load %arg1[%c8, %c0_28, %c0_29] : memref<9x8x4xbf16, #tpu.memory_space<vmem>>, vector<1x8x4xbf16>
    %54 = vector.shape_cast %53 : vector<1x8x4xbf16> to vector<8x4xbf16>
    %cst_30 = arith.constant dense<0.000000e+00> : vector<8x64xf32>
    %55 = tpu.matmul %54, %52, %cst_30 {dimension_numbers = #tpu.dot_dimension_numbers<[1], [0], [0], [1], [0, 0, 1, 1], [], []>} : vector<8x4xbf16>, vector<4x64xbf16>, vector<8x64xf32> -> vector<8x64xf32>
    %56 = arith.addf %50, %55 : vector<8x64xf32>
    %c0_31 = arith.constant 0 : index
    %c0_32 = arith.constant 0 : index
    %57 = vector.load %arg2[%c0_31, %c0_32] : memref<8x1xf32, #tpu.memory_space<vmem>>, vector<8x1xf32>
    %58 = vector.broadcast %57 : vector<8x1xf32> to vector<8x64xf32>
    %59 = arith.addf %56, %58 : vector<8x64xf32>
    %c0_33 = arith.constant 0 : index
    %c0_34 = arith.constant 0 : index
    %c0_35 = arith.constant 0 : index
    %60 = vector.load %arg4[%c0_33, %c0_34, %c0_35] : memref<1x8x64xf32, #tpu.memory_space<vmem>>, vector<1x8x64xf32>
    %61 = vector.shape_cast %60 : vector<1x8x64xf32> to vector<8x64xf32>
    %62 = vector.shape_cast %59 : vector<8x64xf32> to vector<1x8x64xf32>
    tpu.vector_store %arg4[%c0_33, %c0_34, %c0_35], %62 {strides = array<i32>} : memref<1x8x64xf32, #tpu.memory_space<vmem>>, vector<1x8x64xf32>,
    return
  }
  func.func @transform_0(%arg0: i32) -> (i32, i32, i32) {
    %c0_i32 = arith.constant 0 : i32
    %c0_i32_0 = arith.constant 0 : i32
    %c0_i32_1 = arith.constant 0 : i32
    %c0_i32_2 = arith.constant 0 : i32
    return %c0_i32, %c0_i32_0, %c0_i32_1 : i32, i32, i32
  }
  func.func @transform_1(%arg0: i32) -> (i32, i32) {
    %c0_i32 = arith.constant 0 : i32
    %c0_i32_0 = arith.constant 0 : i32
    %c0_i32_1 = arith.constant 0 : i32
    return %c0_i32, %c0_i32_0 : i32, i32
  }
  func.func @transform_2(%arg0: i32) -> (i32, i32, i32, i32) {
    %c0_i32 = arith.constant 0 : i32
    %c0_i32_0 = arith.constant 0 : i32
    %c0_i32_1 = arith.constant 0 : i32
    %c0_i32_2 = arith.constant 0 : i32
    return %arg0, %c0_i32, %c0_i32_0, %c0_i32_1 : i32, i32, i32, i32
  }
  func.func @transform_3(%arg0: i32) -> (i32, i32, i32) {
    %c0_i32 = arith.constant 0 : i32
    %c0_i32_0 = arith.constant 0 : i32
    %c0_i32_1 = arith.constant 0 : i32
    return %arg0, %c0_i32, %c0_i32_0 : i32, i32, i32
  }
}

</mosaic_0001>

<llo_original>
// kernel: _conv2d_pallas_impl.1
$region0: #{_conv2d_pallas_impl.1}
  #allocation0 [shape = 'u32[]', space=smem, size = 0x4, offset = 0x4, fixed_abs, tag = 'smem constant byte address 0x4 - core index']
  #allocation1 [shape = 'u32[144,128]{1,0:T(1,128)}', space=vmem, size = 0x12000, scoped, tag = 'internal scratch']
  %s0 = inlined_call_operand.vmem [shape: bf16[9,8,4], index: 0, kind: input, shape index: {}]
  %s1 = inlined_call_operand.vmem [shape: f32[8,1], index: 1, kind: input, shape index: {}]
  %s2 = inlined_call_operand.vmem [shape: bf16[2,16,9,9], index: 2, kind: input, shape index: {}]
  %s3 = inlined_call_operand.vmem [shape: f32[2,8,64], index: 3, kind: output, shape index: {}]
  %s4 = sld [smem:[#allocation0]]
  $region45: #{_conv2d_pallas_impl.1} parent=0
    _
  %s6 = ssub.s32 1, %s4
  %s7 = scalar_select 0, %s6, %s4
  loop: start=0, step=1, limit=4
  $region2: #{_conv2d_pallas_impl.1} parent=0 // loop_pre_header
    _
  $region3: #{_conv2d_pallas_impl.1} parent=0 // loop_header
    %s9 = sphi 0, %s13
    %p10 = scmp.ge.s32.totalorder %s9, 4
    %s17 = sphi 0, %s17
    %s19 = sphi 0, %s17
    %s20 = sphi 0, %s19
    %s34 = sphi 0, %s20
    %s38 = sphi 0, %s38
    %s40 = sphi 0, %s38
    %s41 = sphi 0, %s40
    %s55 = sphi 0, %s41
    %s61 = sphi 0, %s63
    %s64 = sphi 0, %s61
    %s65 = sphi 0, %s64
    %s81 = sphi 0, %s65
    %s87 = sphi 0, %s89
    %s90 = sphi 0, %s87
    %s91 = sphi 0, %s90
    %s107 = sphi 0, %s91
  $region4: #{_conv2d_pallas_impl.1} parent=0 // loop_header_branch
    %12 = sbr.rel (%p10) target = $region8
  $region5: #{_conv2d_pallas_impl.1} parent=0 // loop_body
    %s14 = ssub.s32 %s9, 1
    %s15 = ssub.s32 %s9, 2
    %s16 = sadd.s32 %s9, 1
    %s18 = sadd.s32 %s17, 1
    %p21 = scmp.eq.s32.totalorder %s9, 1
    %p22 = scmp.ne.s32.totalorder %s17, %s19
    %p23 = scmp.eq.s32.totalorder %s9, 0
    %p24 = por %p22, %p23
    %p25 = scmp.ne.s32.totalorder %s17, %s19
    %p26 = scmp.eq.s32.totalorder %s14, 1
    %p27 = por %p25, %p26
    %p28 = scmp.ne.s32.totalorder %s19, %s20
    %p29 = scmp.eq.s32.totalorder %s14, 0
    %p30 = por %p28, %p29
    %p31 = scmp.ne.s32.totalorder %s19, %s20
    %p32 = scmp.eq.s32.totalorder %s15, 1
    %p33 = por %p31, %p32
    %p35 = scmp.ne.s32.totalorder %s20, %s34
    %p36 = scmp.eq.s32.totalorder %s15, 0
    %p37 = por %p35, %p36
    %s39 = sadd.s32 %s38, 1
    %p42 = scmp.eq.s32.totalorder %s9, 1
    %p43 = scmp.ne.s32.totalorder %s38, %s40
    %p44 = scmp.eq.s32.totalorder %s9, 0
    %p45 = por %p43, %p44
    %p46 = scmp.ne.s32.totalorder %s38, %s40
    %p47 = scmp.eq.s32.totalorder %s14, 1
    %p48 = por %p46, %p47
    %p49 = scmp.ne.s32.totalorder %s40, %s41
    %p50 = scmp.eq.s32.totalorder %s14, 0
    %p51 = por %p49, %p50
    %p52 = scmp.ne.s32.totalorder %s40, %s41
    %p53 = scmp.eq.s32.totalorder %s15, 1
    %p54 = por %p52, %p53
    %p56 = scmp.ne.s32.totalorder %s41, %s55
    %p57 = scmp.eq.s32.totalorder %s15, 0
    %p58 = por %p56, %p57
    %s59 = ssub.s32 %s9, %s16
    %p60 = scmp.eq.s32.totalorder %s59, 0
    %s62 = sadd.s32 %s61, 1
    %s63 = scalar_select %p60, %s61, %s62
    %p66 = pneg %p60
    %p67 = scmp.eq.s32.totalorder %s9, 1
    %p68 = por %p66, %p67
    %p69 = scmp.ne.s32.totalorder %s61, %s64
    %p70 = scmp.eq.s32.totalorder %s9, 0
    %p71 = por %p69, %p70
    %p72 = scmp.ne.s32.totalorder %s61, %s64
    %p73 = scmp.eq.s32.totalorder %s14, 1
    %p74 = por %p72, %p73
    %p75 = scmp.ne.s32.totalorder %s64, %s65
    %p76 = scmp.eq.s32.totalorder %s14, 0
    %p77 = por %p75, %p76
    %p78 = scmp.ne.s32.totalorder %s64, %s65
    %p79 = scmp.eq.s32.totalorder %s15, 1
    %p80 = por %p78, %p79
    %p82 = scmp.ne.s32.totalorder %s65, %s81
    %p83 = scmp.eq.s32.totalorder %s15, 0
    %p84 = por %p82, %p83
    %s85 = ssub.s32 %s9, %s16
    %p86 = scmp.eq.s32.totalorder %s85, 0
    %s88 = sadd.s32 %s87, 1
    %s89 = scalar_select %p86, %s87, %s88
    %p92 = pneg %p86
    %p93 = scmp.eq.s32.totalorder %s9, 1
    %p94 = por %p92, %p93
    %p95 = scmp.ne.s32.totalorder %s87, %s90
    %p96 = scmp.eq.s32.totalorder %s9, 0
    %p97 = por %p95, %p96
    %p98 = scmp.ne.s32.totalorder %s87, %s90
    %p99 = scmp.eq.s32.totalorder %s14, 1
    %p100 = por %p98, %p99
    %p101 = scmp.ne.s32.totalorder %s90, %s91
    %p102 = scmp.eq.s32.totalorder %s14, 0
    %p103 = por %p101, %p102
    %p104 = scmp.ne.s32.totalorder %s90, %s91
    %p105 = scmp.eq.s32.totalorder %s15, 1
    %p106 = por %p104, %p105
    %p108 = scmp.ne.s32.totalorder %s91, %s107
    %p109 = scmp.eq.s32.totalorder %s15, 0
    %p110 = por %p108, %p109
    %p111 = scmp.le.s32.totalorder 1, %s9
    %p112 = scmp.lt.s32.totalorder %s9, 3
    %p113 = pnand %p111, %p112
    %p114 = pneg %p113
    // Predicated region
    $region9: #{_conv2d_pallas_impl.1} parent=5 // pred_check
      _
    $region10: #{_conv2d_pallas_impl.1} parent=5 // pred_check_branch
      %116 = sbr.rel (%p113) target = $region12
    $region11: #{_conv2d_pallas_impl.1} parent=5 // pred_region
      %s117 = ssub.s32 %s9, 1
      // Predicated region
      $region13: #{_conv2d_pallas_impl.1} parent=11 // pred_check
        %p118 = pneg %p30
      $region14: #{_conv2d_pallas_impl.1} parent=11 // pred_check_branch
        %120 = sbr.rel (%p118) target = $region16
      $region15: #{_conv2d_pallas_impl.1} parent=11 // pred_region
        _
      $region16: #{_conv2d_pallas_impl.1} parent=11 // pred_fallthru
        _
      // Predicated region
      $region17: #{_conv2d_pallas_impl.1} parent=11 // pred_check
        %p121 = pneg %p51
      $region18: #{_conv2d_pallas_impl.1} parent=11 // pred_check_branch
        %123 = sbr.rel (%p121) target = $region20
      $region19: #{_conv2d_pallas_impl.1} parent=11 // pred_region
        _
      $region20: #{_conv2d_pallas_impl.1} parent=11 // pred_fallthru
        _
    $region12: #{_conv2d_pallas_impl.1} parent=5 // pred_fallthru
      _
    %p124 = scmp.lt.s32.totalorder %s9, 2
    // Predicated region
    $region21: #{_conv2d_pallas_impl.1} parent=5 // pred_check
      %p125 = pneg %p124
    $region22: #{_conv2d_pallas_impl.1} parent=5 // pred_check_branch
      %127 = sbr.rel (%p125) target = $region24
    $region23: #{_conv2d_pallas_impl.1} parent=5 // pred_region
      // Predicated region
      $region25: #{_conv2d_pallas_impl.1} parent=23 // pred_check
        %p128 = pneg %p71
      $region26: #{_conv2d_pallas_impl.1} parent=23 // pred_check_branch
        %130 = sbr.rel (%p128) target = $region28
      $region27: #{_conv2d_pallas_impl.1} parent=23 // pred_region
        %p131 = scmp.lt.s32.totalorder %s9, 1
        %s132 = scalar_select %p131, %s9, 1
        %s133 = smul.addr %s132, 32
        %s134 = smul.addr %s133, 4
        %s135 = scalar_lea.vmem %s2, %s134
      $region28: #{_conv2d_pallas_impl.1} parent=23 // pred_fallthru
        _
    $region24: #{_conv2d_pallas_impl.1} parent=5 // pred_fallthru
      _
    %p136 = scmp.le.s32.totalorder 1, %s9
    %p137 = scmp.lt.s32.totalorder %s9, 3
    %p138 = pnand %p136, %p137
    %p139 = pneg %p138
    // Predicated region
    $region29: #{_conv2d_pallas_impl.1} parent=5 // pred_check
      _
    $region30: #{_conv2d_pallas_impl.1} parent=5 // pred_check_branch
      %141 = sbr.rel (%p138) target = $region32
    $region31: #{_conv2d_pallas_impl.1} parent=5 // pred_region
      %s142 = ssub.s32 %s9, 1
      %p143 = pneg %p30
      %p144 = pneg %p27
      %p145 = pneg %p51
      %p146 = pneg %p48
      %p147 = scmp.lt.s32.totalorder %s14, 1
      %s148 = scalar_select %p147, %s14, 1
      %s149 = smul.addr %s148, 32
      %s150 = smul.addr %s149, 4
      %s151 = scalar_lea.vmem %s2, %s150
      %p152 = pneg %p77
      %p153 = pneg %p74
      %p154 = pneg %p103
      %p155 = pneg %p100
      %p156 = scmp.lt.s32.totalorder %s14, 1
      %s157 = scalar_select %p156, %s14, 1
      %s158 = smul.addr %s157, 8
      %s159 = scalar_lea.vmem %s3, %s158
      %p160 = scmp.lt.s32.totalorder %s14, 1
      %s161 = scalar_select %p160, %s14, 1
      %s162 = smul.addr %s161, 32
      %s163 = smul.addr %s162, 4
      %s164 = scalar_lea.vmem %s2, %s163
      %p165 = scmp.lt.s32.totalorder %s14, 1
      %s166 = scalar_select %p165, %s14, 1
      %s167 = smul.addr %s166, 8
      %s168 = scalar_lea.vmem %s3, %s167
      %v170 = vld [vmem:[%s164] sm:$0xf]
      %v171 = vld [vmem:[%s164 + $0x4] sm:$0x1]
      %v172 = vld [vmem:[%s164 + $0x8] sm:$0xf]
      %v173 = vld [vmem:[%s164 + $0xc] sm:$0x1]
      %v174 = vld [vmem:[%s164 + $0x10] sm:$0xf]
      %v175 = vld [vmem:[%s164 + $0x14] sm:$0x1]
      %v176 = vld [vmem:[%s164 + $0x18] sm:$0xf]
      %v177 = vld [vmem:[%s164 + $0x1c] sm:$0x1]
      %v178 = vld [vmem:[%s164 + $0x20] sm:$0xf]
      %v179 = vld [vmem:[%s164 + $0x24] sm:$0x1]
      %v180 = vld [vmem:[%s164 + $0x28] sm:$0xf]
      %v181 = vld [vmem:[%s164 + $0x2c] sm:$0x1]
      %v182 = vld [vmem:[%s164 + $0x30] sm:$0xf]
      %v183 = vld [vmem:[%s164 + $0x34] sm:$0x1]
      %v184 = vld [vmem:[%s164 + $0x38] sm:$0xf]
      %v185 = vld [vmem:[%s164 + $0x3c] sm:$0x1]
      %v186 = vld [vmem:[%s164 + $0x40] sm:$0xf]
      %v187 = vld [vmem:[%s164 + $0x48] sm:$0xf]
      %v188 = vld [vmem:[%s164 + $0x50] sm:$0xf]
      %v189 = vld [vmem:[%s164 + $0x58] sm:$0xf]
      %v190 = vld [vmem:[%s164 + $0x60] sm:$0xf]
      %v191 = vld [vmem:[%s164 + $0x68] sm:$0xf]
      %v192 = vld [vmem:[%s164 + $0x70] sm:$0xf]
      %v193 = vld [vmem:[%s164 + $0x78] sm:$0xf]
      %v196 = vpack.i.b16 %v172, %v170
      %v197 = vshrl.u32 %v170, 16
      %v198 = vshrl.u32 %v172, 16
      %v199 = vpack.i.b16 %v198, %v197
      %v202 = vpack.i.b16 %v176, %v174
      %v203 = vshrl.u32 %v174, 16
      %v204 = vshrl.u32 %v176, 16
      %v205 = vpack.i.b16 %v204, %v203
      %v208 = vunpack.c.l.s4 1983009808
      %v209 = vunpack.c.0.s8 %v208
      %v210 = vlaneseq
      %v211 = vshrl.u32 %v210, 7
      %v212 = vsub.s32 %v209, %v211
      %v213 = vrot.slane %v196, %v212
      %v216 = vunpack.c.l.s4 1983009808
      %v217 = vunpack.c.0.s8 %v216
      %v218 = vlaneseq
      %v219 = vshrl.u32 %v218, 7
      %v220 = vsub.s32 %v217, %v219
      %v221 = vrot.slane %v202, %v220
      %v222 = vcombine.low %v213, %v221
      %v223 = vcombine.high %v213, %v221
      %v225 = vunpack.c.l.s4 1934713408
      %v226 = vunpack.c.0.s8 %v225
      %v227 = vlaneseq
      %v228 = vshrl.u32 %v227, 7
      %v229 = vsub.s32 %v226, %v228
      %v230 = vrot.slane %v222, %v229
      %v232 = vunpack.c.l.s4 1934713408
      %v233 = vunpack.c.0.s8 %v232
      %v234 = vlaneseq
      %v235 = vshrl.u32 %v234, 7
      %v236 = vsub.s32 %v233, %v235
      %v237 = vrot.slane %v223, %v236
      %v238 = vcombine.high %v230, 0
      %v239 = vcombine.high %v237, 0
      %v242 = vunpack.c.l.s4 1983009808
      %v243 = vunpack.c.0.s8 %v242
      %v244 = vlaneseq
      %v245 = vshrl.u32 %v244, 7
      %v246 = vsub.s32 %v243, %v245
      %v247 = vrot.slane %v199, %v246
      %v250 = vunpack.c.l.s4 1983009808
      %v251 = vunpack.c.0.s8 %v250
      %v252 = vlaneseq
      %v253 = vshrl.u32 %v252, 7
      %v254 = vsub.s32 %v251, %v253
      %v255 = vrot.slane %v205, %v254
      %v256 = vcombine.low %v247, %v255
      %v257 = vcombine.high %v247, %v255
      %v259 = vunpack.c.l.s4 1934713408
      %v260 = vunpack.c.0.s8 %v259
      %v261 = vlaneseq
      %v262 = vshrl.u32 %v261, 7
      %v263 = vsub.s32 %v260, %v262
      %v264 = vrot.slane %v256, %v263
      %v266 = vunpack.c.l.s4 1934713408
      %v267 = vunpack.c.0.s8 %v266
      %v268 = vlaneseq
      %v269 = vshrl.u32 %v268, 7
      %v270 = vsub.s32 %v267, %v269
      %v271 = vrot.slane %v257, %v270
      %v272 = vcombine.high %v264, 0
      %v273 = vcombine.high %v271, 0
      %v275 = vunpack.c.l.b16 %v264
      %v276 = vpack.c.b16 %v275, %v275
      %277 = vrot.lane.b32.xlu0 %v276, 8
      %v278 = vpop.permute.xlu0 %277
      %v280 = vunpack.c.l.b16 %v238
      %v281 = vpack.c.b16 %v280, %v280
      %282 = vrot.lane.b32.xlu0 %v281, 16
      %v283 = vpop.permute.xlu0 %282
      %v285 = vunpack.c.l.b16 %v272
      %v286 = vpack.c.b16 %v285, %v285
      %287 = vrot.lane.b32.xlu0 %v286, 24
      %v288 = vpop.permute.xlu0 %287
      %v290 = vunpack.c.l.b16 %v237
      %v291 = vpack.c.b16 %v290, %v290
      %292 = vrot.lane.b32.xlu0 %v291, 32
      %v293 = vpop.permute.xlu0 %292
      %v295 = vunpack.c.l.b16 %v271
      %v296 = vpack.c.b16 %v295, %v295
      %297 = vrot.lane.b32.xlu0 %v296, 40
      %v298 = vpop.permute.xlu0 %297
      %v300 = vunpack.c.l.b16 %v239
      %v301 = vpack.c.b16 %v300, %v300
      %302 = vrot.lane.b32.xlu0 %v301, 48
      %v303 = vpop.permute.xlu0 %302
      %v305 = vunpack.c.l.b16 %v273
      %v306 = vpack.c.b16 %v305, %v305
      %307 = vrot.lane.b32.xlu0 %v306, 56
      %v308 = vpop.permute.xlu0 %307
      %vm309 = vcmask 64512
      %v312 = vsel %vm309, %v230, %v278
      %vm313 = vcmask 130048
      %v315 = vsel %vm313, %v312, %v283
      %vm316 = vcmask 195584
      %v318 = vsel %vm316, %v315, %v288
      %vm319 = vcmask 261120
      %v321 = vsel %vm319, %v318, %v293
      %vm322 = vcmask 326656
      %v324 = vsel %vm322, %v321, %v298
      %vm325 = vcmask 392192
      %v327 = vsel %vm325, %v324, %v303
      %vm328 = vcmask 457728
      %v330 = vsel %vm328, %v327, %v308
      %v331 = vld [vmem:[%s0] sm:$0xf]
      %v334 = vpack.i.b16 %v180, %v178
      %v335 = vshrl.u32 %v178, 16
      %v336 = vshrl.u32 %v180, 16
      %v337 = vpack.i.b16 %v336, %v335
      %v340 = vpack.i.b16 %v184, %v182
      %v341 = vshrl.u32 %v182, 16
      %v342 = vshrl.u32 %v184, 16
      %v343 = vpack.i.b16 %v342, %v341
      %v346 = vunpack.c.l.s4 1983009808
      %v347 = vunpack.c.0.s8 %v346
      %v348 = vlaneseq
      %v349 = vshrl.u32 %v348, 7
      %v350 = vsub.s32 %v347, %v349
      %v351 = vrot.slane %v334, %v350
      %v354 = vunpack.c.l.s4 1983009808
      %v355 = vunpack.c.0.s8 %v354
      %v356 = vlaneseq
      %v357 = vshrl.u32 %v356, 7
      %v358 = vsub.s32 %v355, %v357
      %v359 = vrot.slane %v340, %v358
      %v360 = vcombine.low %v351, %v359
      %v361 = vcombine.high %v351, %v359
      %v363 = vunpack.c.l.s4 1934713408
      %v364 = vunpack.c.0.s8 %v363
      %v365 = vlaneseq
      %v366 = vshrl.u32 %v365, 7
      %v367 = vsub.s32 %v364, %v366
      %v368 = vrot.slane %v360, %v367
      %v370 = vunpack.c.l.s4 1934713408
      %v371 = vunpack.c.0.s8 %v370
      %v372 = vlaneseq
      %v373 = vshrl.u32 %v372, 7
      %v374 = vsub.s32 %v371, %v373
      %v375 = vrot.slane %v361, %v374
      %v376 = vcombine.high %v368, 0
      %v377 = vcombine.high %v375, 0
      %v380 = vunpack.c.l.s4 1983009808
      %v381 = vunpack.c.0.s8 %v380
      %v382 = vlaneseq
      %v383 = vshrl.u32 %v382, 7
      %v384 = vsub.s32 %v381, %v383
      %v385 = vrot.slane %v337, %v384
      %v388 = vunpack.c.l.s4 1983009808
      %v389 = vunpack.c.0.s8 %v388
      %v390 = vlaneseq
      %v391 = vshrl.u32 %v390, 7
      %v392 = vsub.s32 %v389, %v391
      %v393 = vrot.slane %v343, %v392
      %v394 = vcombine.low %v385, %v393
      %v395 = vcombine.high %v385, %v393
      %v397 = vunpack.c.l.s4 1934713408
      %v398 = vunpack.c.0.s8 %v397
      %v399 = vlaneseq
      %v400 = vshrl.u32 %v399, 7
      %v401 = vsub.s32 %v398, %v400
      %v402 = vrot.slane %v394, %v401
      %v404 = vunpack.c.l.s4 1934713408
      %v405 = vunpack.c.0.s8 %v404
      %v406 = vlaneseq
      %v407 = vshrl.u32 %v406, 7
      %v408 = vsub.s32 %v405, %v407
      %v409 = vrot.slane %v395, %v408
      %v410 = vcombine.high %v402, 0
      %v411 = vcombine.high %v409, 0
      %v413 = vunpack.c.l.b16 %v402
      %v414 = vpack.c.b16 %v413, %v413
      %415 = vrot.lane.b32.xlu0 %v414, 8
      %v416 = vpop.permute.xlu0 %415
      %v418 = vunpack.c.l.b16 %v376
      %v419 = vpack.c.b16 %v418, %v418
      %420 = vrot.lane.b32.xlu0 %v419, 16
      %v421 = vpop.permute.xlu0 %420
      %v423 = vunpack.c.l.b16 %v410
      %v424 = vpack.c.b16 %v423, %v423
      %425 = vrot.lane.b32.xlu0 %v424, 24
      %v426 = vpop.permute.xlu0 %425
      %v428 = vunpack.c.l.b16 %v375
      %v429 = vpack.c.b16 %v428, %v428
      %430 = vrot.lane.b32.xlu0 %v429, 32
      %v431 = vpop.permute.xlu0 %430
      %v433 = vunpack.c.l.b16 %v409
      %v434 = vpack.c.b16 %v433, %v433
      %435 = vrot.lane.b32.xlu0 %v434, 40
      %v436 = vpop.permute.xlu0 %435
      %v438 = vunpack.c.l.b16 %v377
      %v439 = vpack.c.b16 %v438, %v438
      %440 = vrot.lane.b32.xlu0 %v439, 48
      %v441 = vpop.permute.xlu0 %440
      %v443 = vunpack.c.l.b16 %v411
      %v444 = vpack.c.b16 %v443, %v443
      %445 = vrot.lane.b32.xlu0 %v444, 56
      %v446 = vpop.permute.xlu0 %445
      %v449 = vsel %vm309, %v368, %v416
      %v451 = vsel %vm313, %v449, %v421
      %v453 = vsel %vm316, %v451, %v426
      %v455 = vsel %vm319, %v453, %v431
      %v457 = vsel %vm322, %v455, %v436
      %v459 = vsel %vm325, %v457, %v441
      %v461 = vsel %vm328, %v459, %v446
      %s462 = scalar_lea.vmem %s0, 4
      %v463 = vld [vmem:[%s462] sm:$0xf]
      %vm464 = vcmask 31744
      %v466 = vsel %vm464, %v463, 0
      %vm468 = vcmask 1041408
      %v469 = vsel %vm468, %v461, 0
      %471 = vmatprep.subr.bf16.mxu0 0
      %472 = vmatpush1.bf16.msra.mxu0 %v469
      %473 = vmatprep.subr.bf16.mxu0 0
      %474 = vmatpush1.bf16.msra.mxu0 0
      %475 = vmatprep.subr.bf16.mxu0 0
      %476 = vmatpush1.bf16.msra.mxu0 0
      %477 = vmatprep.subr.bf16.mxu0 0
      %478 = vmatpush1.bf16.msra.mxu0 0
      %479 = vmatprep.subr.bf16.mxu0 0
      %480 = vmatpush1.bf16.msra.mxu0 0
      %481 = vmatprep.subr.bf16.mxu0 0
      %482 = vmatpush1.bf16.msra.mxu0 0
      %483 = vmatprep.subr.bf16.mxu0 0
      %484 = vmatpush1.bf16.msra.mxu0 0
      %485 = vmatprep.subr.bf16.mxu0 0
      %486 = vmatpush1.bf16.msra.mxu0 0
      %487 = vmatprep.subr.bf16.mxu0 0
      %488 = vmatpush1.bf16.msra.mxu0 0
      %489 = vmatprep.subr.bf16.mxu0 0
      %490 = vmatpush1.bf16.msra.mxu0 0
      %491 = vmatprep.subr.bf16.mxu0 0
      %492 = vmatpush1.bf16.msra.mxu0 0
      %493 = vmatprep.subr.bf16.mxu0 0
      %494 = vmatpush1.bf16.msra.mxu0 0
      %495 = vmatprep.subr.bf16.mxu0 0
      %496 = vmatpush1.bf16.msra.mxu0 0
      %497 = vmatprep.subr.bf16.mxu0 0
      %498 = vmatpush1.bf16.msra.mxu0 0
      %499 = vmatprep.subr.bf16.mxu0 0
      %500 = vmatpush1.bf16.msra.mxu0 0
      %501 = vmatprep.subr.bf16.mxu0 0
      %502 = vmatpush1.bf16.msra.mxu0 0
      %503 = vmatprep.mubr.bf16.mxu0 0
      %504 = vmatmul.mubr.bf16.gmra.mrb[0].mxu0 %v466
      %v505 = vpop.f32.mrb[0].mxu0
      %v506 = vadd.f32 0.0, %v505
      %v507 = vpop.f32.mrb[0].mxu0
      %v508 = vpop.f32.mrb[0].mxu0
      %v509 = vpop.f32.mrb[0].mxu0
      %510 = vdwg.mxu0
      %v512 = vsel %vm464, %v331, 0
      %v514 = vsel %vm468, %v330, 0
      %516 = vmatprep.subr.bf16.mxu0 0
      %517 = vmatpush1.bf16.msra.mxu0 %v514
      %518 = vmatprep.subr.bf16.mxu0 0
      %519 = vmatpush1.bf16.msra.mxu0 0
      %520 = vmatprep.subr.bf16.mxu0 0
      %521 = vmatpush1.bf16.msra.mxu0 0
      %522 = vmatprep.subr.bf16.mxu0 0
      %523 = vmatpush1.bf16.msra.mxu0 0
      %524 = vmatprep.subr.bf16.mxu0 0
      %525 = vmatpush1.bf16.msra.mxu0 0
      %526 = vmatprep.subr.bf16.mxu0 0
      %527 = vmatpush1.bf16.msra.mxu0 0
      %528 = vmatprep.subr.bf16.mxu0 0
      %529 = vmatpush1.bf16.msra.mxu0 0
      %530 = vmatprep.subr.bf16.mxu0 0
      %531 = vmatpush1.bf16.msra.mxu0 0
      %532 = vmatprep.subr.bf16.mxu0 0
      %533 = vmatpush1.bf16.msra.mxu0 0
      %534 = vmatprep.subr.bf16.mxu0 0
      %535 = vmatpush1.bf16.msra.mxu0 0
      %536 = vmatprep.subr.bf16.mxu0 0
      %537 = vmatpush1.bf16.msra.mxu0 0
      %538 = vmatprep.subr.bf16.mxu0 0
      %539 = vmatpush1.bf16.msra.mxu0 0
      %540 = vmatprep.subr.bf16.mxu0 0
      %541 = vmatpush1.bf16.msra.mxu0 0
      %542 = vmatprep.subr.bf16.mxu0 0
      %543 = vmatpush1.bf16.msra.mxu0 0
      %544 = vmatprep.subr.bf16.mxu0 0
      %545 = vmatpush1.bf16.msra.mxu0 0
      %546 = vmatprep.subr.bf16.mxu0 0
      %547 = vmatpush1.bf16.msra.mxu0 0
      %548 = vmatprep.mubr.bf16.mxu0 0
      %549 = vmatmul.mubr.bf16.gmra.mrb[0].mxu0 %v512
      %v550 = vpop.f32.mrb[0].mxu0
      %v551 = vadd.f32 %v506, %v550
      %v552 = vpop.f32.mrb[0].mxu0
      %v553 = vpop.f32.mrb[0].mxu0
      %v554 = vpop.f32.mrb[0].mxu0
      %555 = vdwg.mxu0
      %560 = vrot.lane.b32.xlu0 %v170, 127
      %v561 = vpop.permute.xlu0 %560
      %562 = vrot.lane.b32.xlu0 %v172, 127
      %v563 = vpop.permute.xlu0 %562
      %564 = vrot.lane.b32.xlu0 %v174, 127
      %v565 = vpop.permute.xlu0 %564
      %566 = vrot.lane.b32.xlu0 %v176, 127
      %v567 = vpop.permute.xlu0 %566
      %v570 = vpack.i.b16 %v563, %v561
      %v571 = vshrl.u32 %v561, 16
      %v572 = vshrl.u32 %v563, 16
      %v573 = vpack.i.b16 %v572, %v571
      %v576 = vpack.i.b16 %v567, %v565
      %v577 = vshrl.u32 %v565, 16
      %v578 = vshrl.u32 %v567, 16
      %v579 = vpack.i.b16 %v578, %v577
      %v582 = vunpack.c.l.s4 1983009808
      %v583 = vunpack.c.0.s8 %v582
      %v584 = vlaneseq
      %v585 = vshrl.u32 %v584, 7
      %v586 = vsub.s32 %v583, %v585
      %v587 = vrot.slane %v570, %v586
      %v590 = vunpack.c.l.s4 1983009808
      %v591 = vunpack.c.0.s8 %v590
      %v592 = vlaneseq
      %v593 = vshrl.u32 %v592, 7
      %v594 = vsub.s32 %v591, %v593
      %v595 = vrot.slane %v576, %v594
      %v596 = vcombine.low %v587, %v595
      %v597 = vcombine.high %v587, %v595
      %v599 = vunpack.c.l.s4 1934713408
      %v600 = vunpack.c.0.s8 %v599
      %v601 = vlaneseq
      %v602 = vshrl.u32 %v601, 7
      %v603 = vsub.s32 %v600, %v602
      %v604 = vrot.slane %v596, %v603
      %v606 = vunpack.c.l.s4 1934713408
      %v607 = vunpack.c.0.s8 %v606
      %v608 = vlaneseq
      %v609 = vshrl.u32 %v608, 7
      %v610 = vsub.s32 %v607, %v609
      %v611 = vrot.slane %v597, %v610
      %v612 = vcombine.high %v604, 0
      %v613 = vcombine.high %v611, 0
      %v616 = vunpack.c.l.s4 1983009808
      %v617 = vunpack.c.0.s8 %v616
      %v618 = vlaneseq
      %v619 = vshrl.u32 %v618, 7
      %v620 = vsub.s32 %v617, %v619
      %v621 = vrot.slane %v573, %v620
      %v624 = vunpack.c.l.s4 1983009808
      %v625 = vunpack.c.0.s8 %v624
      %v626 = vlaneseq
      %v627 = vshrl.u32 %v626, 7
      %v628 = vsub.s32 %v625, %v627
      %v629 = vrot.slane %v579, %v628
      %v630 = vcombine.low %v621, %v629
      %v631 = vcombine.high %v621, %v629
      %v633 = vunpack.c.l.s4 1934713408
      %v634 = vunpack.c.0.s8 %v633
      %v635 = vlaneseq
      %v636 = vshrl.u32 %v635, 7
      %v637 = vsub.s32 %v634, %v636
      %v638 = vrot.slane %v630, %v637
      %v640 = vunpack.c.l.s4 1934713408
      %v641 = vunpack.c.0.s8 %v640
      %v642 = vlaneseq
      %v643 = vshrl.u32 %v642, 7
      %v644 = vsub.s32 %v641, %v643
      %v645 = vrot.slane %v631, %v644
      %v646 = vcombine.high %v638, 0
      %v647 = vcombine.high %v645, 0
      %v649 = vunpack.c.l.b16 %v638
      %v650 = vpack.c.b16 %v649, %v649
      %651 = vrot.lane.b32.xlu0 %v650, 8
      %v652 = vpop.permute.xlu0 %651
      %v654 = vunpack.c.l.b16 %v612
      %v655 = vpack.c.b16 %v654, %v654
      %656 = vrot.lane.b32.xlu0 %v655, 16
      %v657 = vpop.permute.xlu0 %656
      %v659 = vunpack.c.l.b16 %v646
      %v660 = vpack.c.b16 %v659, %v659
      %661 = vrot.lane.b32.xlu0 %v660, 24
      %v662 = vpop.permute.xlu0 %661
      %v664 = vunpack.c.l.b16 %v611
      %v665 = vpack.c.b16 %v664, %v664
      %666 = vrot.lane.b32.xlu0 %v665, 32
      %v667 = vpop.permute.xlu0 %666
      %v669 = vunpack.c.l.b16 %v645
      %v670 = vpack.c.b16 %v669, %v669
      %671 = vrot.lane.b32.xlu0 %v670, 40
      %v672 = vpop.permute.xlu0 %671
      %v674 = vunpack.c.l.b16 %v613
      %v675 = vpack.c.b16 %v674, %v674
      %676 = vrot.lane.b32.xlu0 %v675, 48
      %v677 = vpop.permute.xlu0 %676
      %v679 = vunpack.c.l.b16 %v647
      %v680 = vpack.c.b16 %v679, %v679
      %681 = vrot.lane.b32.xlu0 %v680, 56
      %v682 = vpop.permute.xlu0 %681
      %v685 = vsel %vm309, %v604, %v652
      %v687 = vsel %vm313, %v685, %v657
      %v689 = vsel %vm316, %v687, %v662
      %v691 = vsel %vm319, %v689, %v667
      %v693 = vsel %vm322, %v691, %v672
      %v695 = vsel %vm325, %v693, %v677
      %v697 = vsel %vm328, %v695, %v682
      %s698 = scalar_lea.vmem %s0, 8
      %v699 = vld [vmem:[%s698] sm:$0xf]
      %v701 = vsel %vm464, %v699, 0
      %v703 = vsel %vm468, %v697, 0
      %705 = vmatprep.subr.bf16.mxu0 0
      %706 = vmatpush1.bf16.msra.mxu0 %v703
      %707 = vmatprep.subr.bf16.mxu0 0
      %708 = vmatpush1.bf16.msra.mxu0 0
      %709 = vmatprep.subr.bf16.mxu0 0
      %710 = vmatpush1.bf16.msra.mxu0 0
      %711 = vmatprep.subr.bf16.mxu0 0
      %712 = vmatpush1.bf16.msra.mxu0 0
      %713 = vmatprep.subr.bf16.mxu0 0
      %714 = vmatpush1.bf16.msra.mxu0 0
      %715 = vmatprep.subr.bf16.mxu0 0
      %716 = vmatpush1.bf16.msra.mxu0 0
      %717 = vmatprep.subr.bf16.mxu0 0
      %718 = vmatpush1.bf16.msra.mxu0 0
      %719 = vmatprep.subr.bf16.mxu0 0
      %720 = vmatpush1.bf16.msra.mxu0 0
      %721 = vmatprep.subr.bf16.mxu0 0
      %722 = vmatpush1.bf16.msra.mxu0 0
      %723 = vmatprep.subr.bf16.mxu0 0
      %724 = vmatpush1.bf16.msra.mxu0 0
      %725 = vmatprep.subr.bf16.mxu0 0
      %726 = vmatpush1.bf16.msra.mxu0 0
      %727 = vmatprep.subr.bf16.mxu0 0
      %728 = vmatpush1.bf16.msra.mxu0 0
      %729 = vmatprep.subr.bf16.mxu0 0
      %730 = vmatpush1.bf16.msra.mxu0 0
      %731 = vmatprep.subr.bf16.mxu0 0
      %732 = vmatpush1.bf16.msra.mxu0 0
      %733 = vmatprep.subr.bf16.mxu0 0
      %734 = vmatpush1.bf16.msra.mxu0 0
      %735 = vmatprep.subr.bf16.mxu0 0
      %736 = vmatpush1.bf16.msra.mxu0 0
      %737 = vmatprep.mubr.bf16.mxu0 0
      %738 = vmatmul.mubr.bf16.gmra.mrb[0].mxu0 %v701
      %v739 = vpop.f32.mrb[0].mxu0
      %v740 = vadd.f32 0.0, %v739
      %v741 = vpop.f32.mrb[0].mxu0
      %v742 = vpop.f32.mrb[0].mxu0
      %v743 = vpop.f32.mrb[0].mxu0
      %744 = vdwg.mxu0
      %v745 = vadd.f32 %v551, %v740
      %v748 = vpack.i.b16 %v187, %v186
      %v749 = vshrl.u32 %v186, 16
      %v750 = vshrl.u32 %v187, 16
      %v751 = vpack.i.b16 %v750, %v749
      %v754 = vpack.i.b16 %v189, %v188
      %v755 = vshrl.u32 %v188, 16
      %v756 = vshrl.u32 %v189, 16
      %v757 = vpack.i.b16 %v756, %v755
      %v760 = vunpack.c.l.s4 1983009808
      %v761 = vunpack.c.0.s8 %v760
      %v762 = vlaneseq
      %v763 = vshrl.u32 %v762, 7
      %v764 = vsub.s32 %v761, %v763
      %v765 = vrot.slane %v748, %v764
      %v768 = vunpack.c.l.s4 1983009808
      %v769 = vunpack.c.0.s8 %v768
      %v770 = vlaneseq
      %v771 = vshrl.u32 %v770, 7
      %v772 = vsub.s32 %v769, %v771
      %v773 = vrot.slane %v754, %v772
      %v774 = vcombine.low %v765, %v773
      %v775 = vcombine.high %v765, %v773
      %v777 = vunpack.c.l.s4 1934713408
      %v778 = vunpack.c.0.s8 %v777
      %v779 = vlaneseq
      %v780 = vshrl.u32 %v779, 7
      %v781 = vsub.s32 %v778, %v780
      %v782 = vrot.slane %v774, %v781
      %v784 = vunpack.c.l.s4 1934713408
      %v785 = vunpack.c.0.s8 %v784
      %v786 = vlaneseq
      %v787 = vshrl.u32 %v786, 7
      %v788 = vsub.s32 %v785, %v787
      %v789 = vrot.slane %v775, %v788
      %v790 = vcombine.high %v782, 0
      %v791 = vcombine.high %v789, 0
      %v794 = vunpack.c.l.s4 1983009808
      %v795 = vunpack.c.0.s8 %v794
      %v796 = vlaneseq
      %v797 = vshrl.u32 %v796, 7
      %v798 = vsub.s32 %v795, %v797
      %v799 = vrot.slane %v751, %v798
      %v802 = vunpack.c.l.s4 1983009808
      %v803 = vunpack.c.0.s8 %v802
      %v804 = vlaneseq
      %v805 = vshrl.u32 %v804, 7
      %v806 = vsub.s32 %v803, %v805
      %v807 = vrot.slane %v757, %v806
      %v808 = vcombine.low %v799, %v807
      %v809 = vcombine.high %v799, %v807
      %v811 = vunpack.c.l.s4 1934713408
      %v812 = vunpack.c.0.s8 %v811
      %v813 = vlaneseq
      %v814 = vshrl.u32 %v813, 7
      %v815 = vsub.s32 %v812, %v814
      %v816 = vrot.slane %v808, %v815
      %v818 = vunpack.c.l.s4 1934713408
      %v819 = vunpack.c.0.s8 %v818
      %v820 = vlaneseq
      %v821 = vshrl.u32 %v820, 7
      %v822 = vsub.s32 %v819, %v821
      %v823 = vrot.slane %v809, %v822
      %v824 = vcombine.high %v816, 0
      %v825 = vcombine.high %v823, 0
      %v827 = vunpack.c.l.b16 %v816
      %v828 = vpack.c.b16 %v827, %v827
      %829 = vrot.lane.b32.xlu0 %v828, 8
      %v830 = vpop.permute.xlu0 %829
      %v832 = vunpack.c.l.b16 %v790
      %v833 = vpack.c.b16 %v832, %v832
      %834 = vrot.lane.b32.xlu0 %v833, 16
      %v835 = vpop.permute.xlu0 %834
      %v837 = vunpack.c.l.b16 %v824
      %v838 = vpack.c.b16 %v837, %v837
      %839 = vrot.lane.b32.xlu0 %v838, 24
      %v840 = vpop.permute.xlu0 %839
      %v842 = vunpack.c.l.b16 %v789
      %v843 = vpack.c.b16 %v842, %v842
      %844 = vrot.lane.b32.xlu0 %v843, 32
      %v845 = vpop.permute.xlu0 %844
      %v847 = vunpack.c.l.b16 %v823
      %v848 = vpack.c.b16 %v847, %v847
      %849 = vrot.lane.b32.xlu0 %v848, 40
      %v850 = vpop.permute.xlu0 %849
      %v852 = vunpack.c.l.b16 %v791
      %v853 = vpack.c.b16 %v852, %v852
      %854 = vrot.lane.b32.xlu0 %v853, 48
      %v855 = vpop.permute.xlu0 %854
      %v857 = vunpack.c.l.b16 %v825
      %v858 = vpack.c.b16 %v857, %v857
      %859 = vrot.lane.b32.xlu0 %v858, 56
      %v860 = vpop.permute.xlu0 %859
      %v863 = vsel %vm309, %v782, %v830
      %v865 = vsel %vm313, %v863, %v835
      %v867 = vsel %vm316, %v865, %v840
      %v869 = vsel %vm319, %v867, %v845
      %v871 = vsel %vm322, %v869, %v850
      %v873 = vsel %vm325, %v871, %v855
      %v875 = vsel %vm328, %v873, %v860
      %s876 = scalar_lea.vmem %s0, 12
      %v877 = vld [vmem:[%s876] sm:$0xf]
      %v879 = vsel %vm464, %v877, 0
      %v881 = vsel %vm468, %v875, 0
      %883 = vmatprep.subr.bf16.mxu0 0
      %884 = vmatpush1.bf16.msra.mxu0 %v881
      %885 = vmatprep.subr.bf16.mxu0 0
      %886 = vmatpush1.bf16.msra.mxu0 0
      %887 = vmatprep.subr.bf16.mxu0 0
      %888 = vmatpush1.bf16.msra.mxu0 0
      %889 = vmatprep.subr.bf16.mxu0 0
      %890 = vmatpush1.bf16.msra.mxu0 0
      %891 = vmatprep.subr.bf16.mxu0 0
      %892 = vmatpush1.bf16.msra.mxu0 0
      %893 = vmatprep.subr.bf16.mxu0 0
      %894 = vmatpush1.bf16.msra.mxu0 0
      %895 = vmatprep.subr.bf16.mxu0 0
      %896 = vmatpush1.bf16.msra.mxu0 0
      %897 = vmatprep.subr.bf16.mxu0 0
      %898 = vmatpush1.bf16.msra.mxu0 0
      %899 = vmatprep.subr.bf16.mxu0 0
      %900 = vmatpush1.bf16.msra.mxu0 0
      %901 = vmatprep.subr.bf16.mxu0 0
      %902 = vmatpush1.bf16.msra.mxu0 0
      %903 = vmatprep.subr.bf16.mxu0 0
      %904 = vmatpush1.bf16.msra.mxu0 0
      %905 = vmatprep.subr.bf16.mxu0 0
      %906 = vmatpush1.bf16.msra.mxu0 0
      %907 = vmatprep.subr.bf16.mxu0 0
      %908 = vmatpush1.bf16.msra.mxu0 0
      %909 = vmatprep.subr.bf16.mxu0 0
      %910 = vmatpush1.bf16.msra.mxu0 0
      %911 = vmatprep.subr.bf16.mxu0 0
      %912 = vmatpush1.bf16.msra.mxu0 0
      %913 = vmatprep.subr.bf16.mxu0 0
      %914 = vmatpush1.bf16.msra.mxu0 0
      %915 = vmatprep.mubr.bf16.mxu0 0
      %916 = vmatmul.mubr.bf16.gmra.mrb[0].mxu0 %v879
      %v917 = vpop.f32.mrb[0].mxu0
      %v918 = vadd.f32 0.0, %v917
      %v919 = vpop.f32.mrb[0].mxu0
      %v920 = vpop.f32.mrb[0].mxu0
      %v921 = vpop.f32.mrb[0].mxu0
      %922 = vdwg.mxu0
      %v923 = vadd.f32 %v745, %v918
      %v926 = vpack.i.b16 %v191, %v190
      %v927 = vshrl.u32 %v190, 16
      %v928 = vshrl.u32 %v191, 16
      %v929 = vpack.i.b16 %v928, %v927
      %v932 = vpack.i.b16 %v193, %v192
      %v933 = vshrl.u32 %v192, 16
      %v934 = vshrl.u32 %v193, 16
      %v935 = vpack.i.b16 %v934, %v933
      %v938 = vunpack.c.l.s4 1983009808
      %v939 = vunpack.c.0.s8 %v938
      %v940 = vlaneseq
      %v941 = vshrl.u32 %v940, 7
      %v942 = vsub.s32 %v939, %v941
      %v943 = vrot.slane %v926, %v942
      %v946 = vunpack.c.l.s4 1983009808
      %v947 = vunpack.c.0.s8 %v946
      %v948 = vlaneseq
      %v949 = vshrl.u32 %v948, 7
      %v950 = vsub.s32 %v947, %v949
      %v951 = vrot.slane %v932, %v950
      %v952 = vcombine.low %v943, %v951
      %v953 = vcombine.high %v943, %v951
      %v955 = vunpack.c.l.s4 1934713408
      %v956 = vunpack.c.0.s8 %v955
      %v957 = vlaneseq
      %v958 = vshrl.u32 %v957, 7
      %v959 = vsub.s32 %v956, %v958
      %v960 = vrot.slane %v952, %v959
      %v962 = vunpack.c.l.s4 1934713408
      %v963 = vunpack.c.0.s8 %v962
      %v964 = vlaneseq
      %v965 = vshrl.u32 %v964, 7
      %v966 = vsub.s32 %v963, %v965
      %v967 = vrot.slane %v953, %v966
      %v968 = vcombine.high %v960, 0
      %v969 = vcombine.high %v967, 0
      %v972 = vunpack.c.l.s4 1983009808
      %v973 = vunpack.c.0.s8 %v972
      %v974 = vlaneseq
      %v975 = vshrl.u32 %v974, 7
      %v976 = vsub.s32 %v973, %v975
      %v977 = vrot.slane %v929, %v976
      %v980 = vunpack.c.l.s4 1983009808
      %v981 = vunpack.c.0.s8 %v980
      %v982 = vlaneseq
      %v983 = vshrl.u32 %v982, 7
      %v984 = vsub.s32 %v981, %v983
      %v985 = vrot.slane %v935, %v984
      %v986 = vcombine.low %v977, %v985
      %v987 = vcombine.high %v977, %v985
      %v989 = vunpack.c.l.s4 1934713408
      %v990 = vunpack.c.0.s8 %v989
      %v991 = vlaneseq
      %v992 = vshrl.u32 %v991, 7
      %v993 = vsub.s32 %v990, %v992
      %v994 = vrot.slane %v986, %v993
      %v996 = vunpack.c.l.s4 1934713408
      %v997 = vunpack.c.0.s8 %v996
      %v998 = vlaneseq
      %v999 = vshrl.u32 %v998, 7
      %v1000 = vsub.s32 %v997, %v999
      %v1001 = vrot.slane %v987, %v1000
      %v1002 = vcombine.high %v994, 0
      %v1003 = vcombine.high %v1001, 0
      %v1005 = vunpack.c.l.b16 %v994
      %v1006 = vpack.c.b16 %v1005, %v1005
      %1007 = vrot.lane.b32.xlu0 %v1006, 8
      %v1008 = vpop.permute.xlu0 %1007
      %v1010 = vunpack.c.l.b16 %v968
      %v1011 = vpack.c.b16 %v1010, %v1010
      %1012 = vrot.lane.b32.xlu0 %v1011, 16
      %v1013 = vpop.permute.xlu0 %1012
      %v1015 = vunpack.c.l.b16 %v1002
      %v1016 = vpack.c.b16 %v1015, %v1015
      %1017 = vrot.lane.b32.xlu0 %v1016, 24
      %v1018 = vpop.permute.xlu0 %1017
      %v1020 = vunpack.c.l.b16 %v967
      %v1021 = vpack.c.b16 %v1020, %v1020
      %1022 = vrot.lane.b32.xlu0 %v1021, 32
      %v1023 = vpop.permute.xlu0 %1022
      %v1025 = vunpack.c.l.b16 %v1001
      %v1026 = vpack.c.b16 %v1025, %v1025
      %1027 = vrot.lane.b32.xlu0 %v1026, 40
      %v1028 = vpop.permute.xlu0 %1027
      %v1030 = vunpack.c.l.b16 %v969
      %v1031 = vpack.c.b16 %v1030, %v1030
      %1032 = vrot.lane.b32.xlu0 %v1031, 48
      %v1033 = vpop.permute.xlu0 %1032
      %v1035 = vunpack.c.l.b16 %v1003
      %v1036 = vpack.c.b16 %v1035, %v1035
      %1037 = vrot.lane.b32.xlu0 %v1036, 56
      %v1038 = vpop.permute.xlu0 %1037
      %v1041 = vsel %vm309, %v960, %v1008
      %v1043 = vsel %vm313, %v1041, %v1013
      %v1045 = vsel %vm316, %v1043, %v1018
      %v1047 = vsel %vm319, %v1045, %v1023
      %v1049 = vsel %vm322, %v1047, %v1028
      %v1051 = vsel %vm325, %v1049, %v1033
      %v1053 = vsel %vm328, %v1051, %v1038
      %s1054 = scalar_lea.vmem %s0, 16
      %v1055 = vld [vmem:[%s1054] sm:$0xf]
      %v1057 = vsel %vm464, %v1055, 0
      %v1059 = vsel %vm468, %v1053, 0
      %1061 = vmatprep.subr.bf16.mxu0 0
      %1062 = vmatpush1.bf16.msra.mxu0 %v1059
      %1063 = vmatprep.subr.bf16.mxu0 0
      %1064 = vmatpush1.bf16.msra.mxu0 0
      %1065 = vmatprep.subr.bf16.mxu0 0
      %1066 = vmatpush1.bf16.msra.mxu0 0
      %1067 = vmatprep.subr.bf16.mxu0 0
      %1068 = vmatpush1.bf16.msra.mxu0 0
      %1069 = vmatprep.subr.bf16.mxu0 0
      %1070 = vmatpush1.bf16.msra.mxu0 0
      %1071 = vmatprep.subr.bf16.mxu0 0
      %1072 = vmatpush1.bf16.msra.mxu0 0
      %1073 = vmatprep.subr.bf16.mxu0 0
      %1074 = vmatpush1.bf16.msra.mxu0 0
      %1075 = vmatprep.subr.bf16.mxu0 0
      %1076 = vmatpush1.bf16.msra.mxu0 0
      %1077 = vmatprep.subr.bf16.mxu0 0
      %1078 = vmatpush1.bf16.msra.mxu0 0
      %1079 = vmatprep.subr.bf16.mxu0 0
      %1080 = vmatpush1.bf16.msra.mxu0 0
      %1081 = vmatprep.subr.bf16.mxu0 0
      %1082 = vmatpush1.bf16.msra.mxu0 0
      %1083 = vmatprep.subr.bf16.mxu0 0
      %1084 = vmatpush1.bf16.msra.mxu0 0
      %1085 = vmatprep.subr.bf16.mxu0 0
      %1086 = vmatpush1.bf16.msra.mxu0 0
      %1087 = vmatprep.subr.bf16.mxu0 0
      %1088 = vmatpush1.bf16.msra.mxu0 0
      %1089 = vmatprep.subr.bf16.mxu0 0
      %1090 = vmatpush1.bf16.msra.mxu0 0
      %1091 = vmatprep.subr.bf16.mxu0 0
      %1092 = vmatpush1.bf16.msra.mxu0 0
      %1093 = vmatprep.mubr.bf16.mxu0 0
      %1094 = vmatmul.mubr.bf16.gmra.mrb[0].mxu0 %v1057
      %v1095 = vpop.f32.mrb[0].mxu0
      %v1096 = vadd.f32 0.0, %v1095
      %v1097 = vpop.f32.mrb[0].mxu0
      %v1098 = vpop.f32.mrb[0].mxu0
      %v1099 = vpop.f32.mrb[0].mxu0
      %1100 = vdwg.mxu0
      %v1101 = vadd.f32 %v923, %v1096
      %1106 = vrot.lane.b32.xlu0 %v186, 127
      %v1107 = vpop.permute.xlu0 %1106
      %1108 = vrot.lane.b32.xlu0 %v187, 127
      %v1109 = vpop.permute.xlu0 %1108
      %1110 = vrot.lane.b32.xlu0 %v188, 127
      %v1111 = vpop.permute.xlu0 %1110
      %1112 = vrot.lane.b32.xlu0 %v189, 127
      %v1113 = vpop.permute.xlu0 %1112
      %v1116 = vpack.i.b16 %v1109, %v1107
      %v1117 = vshrl.u32 %v1107, 16
      %v1118 = vshrl.u32 %v1109, 16
      %v1119 = vpack.i.b16 %v1118, %v1117
      %v1122 = vpack.i.b16 %v1113, %v1111
      %v1123 = vshrl.u32 %v1111, 16
      %v1124 = vshrl.u32 %v1113, 16
      %v1125 = vpack.i.b16 %v1124, %v1123
      %v1128 = vunpack.c.l.s4 1983009808
      %v1129 = vunpack.c.0.s8 %v1128
      %v1130 = vlaneseq
      %v1131 = vshrl.u32 %v1130, 7
      %v1132 = vsub.s32 %v1129, %v1131
      %v1133 = vrot.slane %v1116, %v1132
      %v1136 = vunpack.c.l.s4 1983009808
      %v1137 = vunpack.c.0.s8 %v1136
      %v1138 = vlaneseq
      %v1139 = vshrl.u32 %v1138, 7
      %v1140 = vsub.s32 %v1137, %v1139
      %v1141 = vrot.slane %v1122, %v1140
      %v1142 = vcombine.low %v1133, %v1141
      %v1143 = vcombine.high %v1133, %v1141
      %v1145 = vunpack.c.l.s4 1934713408
      %v1146 = vunpack.c.0.s8 %v1145
      %v1147 = vlaneseq
      %v1148 = vshrl.u32 %v1147, 7
      %v1149 = vsub.s32 %v1146, %v1148
      %v1150 = vrot.slane %v1142, %v1149
      %v1152 = vunpack.c.l.s4 1934713408
      %v1153 = vunpack.c.0.s8 %v1152
      %v1154 = vlaneseq
      %v1155 = vshrl.u32 %v1154, 7
      %v1156 = vsub.s32 %v1153, %v1155
      %v1157 = vrot.slane %v1143, %v1156
      %v1158 = vcombine.high %v1150, 0
      %v1159 = vcombine.high %v1157, 0
      %v1162 = vunpack.c.l.s4 1983009808
      %v1163 = vunpack.c.0.s8 %v1162
      %v1164 = vlaneseq
      %v1165 = vshrl.u32 %v1164, 7
      %v1166 = vsub.s32 %v1163, %v1165
      %v1167 = vrot.slane %v1119, %v1166
      %v1170 = vunpack.c.l.s4 1983009808
      %v1171 = vunpack.c.0.s8 %v1170
      %v1172 = vlaneseq
      %v1173 = vshrl.u32 %v1172, 7
      %v1174 = vsub.s32 %v1171, %v1173
      %v1175 = vrot.slane %v1125, %v1174
      %v1176 = vcombine.low %v1167, %v1175
      %v1177 = vcombine.high %v1167, %v1175
      %v1179 = vunpack.c.l.s4 1934713408
      %v1180 = vunpack.c.0.s8 %v1179
      %v1181 = vlaneseq
      %v1182 = vshrl.u32 %v1181, 7
      %v1183 = vsub.s32 %v1180, %v1182
      %v1184 = vrot.slane %v1176, %v1183
      %v1186 = vunpack.c.l.s4 1934713408
      %v1187 = vunpack.c.0.s8 %v1186
      %v1188 = vlaneseq
      %v1189 = vshrl.u32 %v1188, 7
      %v1190 = vsub.s32 %v1187, %v1189
      %v1191 = vrot.slane %v1177, %v1190
      %v1192 = vcombine.high %v1184, 0
      %v1193 = vcombine.high %v1191, 0
      %v1195 = vunpack.c.l.b16 %v1184
      %v1196 = vpack.c.b16 %v1195, %v1195
      %1197 = vrot.lane.b32.xlu0 %v1196, 8
      %v1198 = vpop.permute.xlu0 %1197
      %v1200 = vunpack.c.l.b16 %v1158
      %v1201 = vpack.c.b16 %v1200, %v1200
      %1202 = vrot.lane.b32.xlu0 %v1201, 16
      %v1203 = vpop.permute.xlu0 %1202
      %v1205 = vunpack.c.l.b16 %v1192
      %v1206 = vpack.c.b16 %v1205, %v1205
      %1207 = vrot.lane.b32.xlu0 %v1206, 24
      %v1208 = vpop.permute.xlu0 %1207
      %v1210 = vunpack.c.l.b16 %v1157
      %v1211 = vpack.c.b16 %v1210, %v1210
      %1212 = vrot.lane.b32.xlu0 %v1211, 32
      %v1213 = vpop.permute.xlu0 %1212
      %v1215 = vunpack.c.l.b16 %v1191
      %v1216 = vpack.c.b16 %v1215, %v1215
      %1217 = vrot.lane.b32.xlu0 %v1216, 40
      %v1218 = vpop.permute.xlu0 %1217
      %v1220 = vunpack.c.l.b16 %v1159
      %v1221 = vpack.c.b16 %v1220, %v1220
      %1222 = vrot.lane.b32.xlu0 %v1221, 48
      %v1223 = vpop.permute.xlu0 %1222
      %v1225 = vunpack.c.l.b16 %v1193
      %v1226 = vpack.c.b16 %v1225, %v1225
      %1227 = vrot.lane.b32.xlu0 %v1226, 56
      %v1228 = vpop.permute.xlu0 %1227
      %v1231 = vsel %vm309, %v1150, %v1198
      %v1233 = vsel %vm313, %v1231, %v1203
      %v1235 = vsel %vm316, %v1233, %v1208
      %v1237 = vsel %vm319, %v1235, %v1213
      %v1239 = vsel %vm322, %v1237, %v1218
      %v1241 = vsel %vm325, %v1239, %v1223
      %v1243 = vsel %vm328, %v1241, %v1228
      %s1244 = scalar_lea.vmem %s0, 20
      %v1245 = vld [vmem:[%s1244] sm:$0xf]
      %v1247 = vsel %vm464, %v1245, 0
      %v1249 = vsel %vm468, %v1243, 0
      %1251 = vmatprep.subr.bf16.mxu0 0
      %1252 = vmatpush1.bf16.msra.mxu0 %v1249
      %1253 = vmatprep.subr.bf16.mxu0 0
      %1254 = vmatpush1.bf16.msra.mxu0 0
      %1255 = vmatprep.subr.bf16.mxu0 0
      %1256 = vmatpush1.bf16.msra.mxu0 0
      %1257 = vmatprep.subr.bf16.mxu0 0
      %1258 = vmatpush1.bf16.msra.mxu0 0
      %1259 = vmatprep.subr.bf16.mxu0 0
      %1260 = vmatpush1.bf16.msra.mxu0 0
      %1261 = vmatprep.subr.bf16.mxu0 0
      %1262 = vmatpush1.bf16.msra.mxu0 0
      %1263 = vmatprep.subr.bf16.mxu0 0
      %1264 = vmatpush1.bf16.msra.mxu0 0
      %1265 = vmatprep.subr.bf16.mxu0 0
      %1266 = vmatpush1.bf16.msra.mxu0 0
      %1267 = vmatprep.subr.bf16.mxu0 0
      %1268 = vmatpush1.bf16.msra.mxu0 0
      %1269 = vmatprep.subr.bf16.mxu0 0
      %1270 = vmatpush1.bf16.msra.mxu0 0
      %1271 = vmatprep.subr.bf16.mxu0 0
      %1272 = vmatpush1.bf16.msra.mxu0 0
      %1273 = vmatprep.subr.bf16.mxu0 0
      %1274 = vmatpush1.bf16.msra.mxu0 0
      %1275 = vmatprep.subr.bf16.mxu0 0
      %1276 = vmatpush1.bf16.msra.mxu0 0
      %1277 = vmatprep.subr.bf16.mxu0 0
      %1278 = vmatpush1.bf16.msra.mxu0 0
      %1279 = vmatprep.subr.bf16.mxu0 0
      %1280 = vmatpush1.bf16.msra.mxu0 0
      %1281 = vmatprep.subr.bf16.mxu0 0
      %1282 = vmatpush1.bf16.msra.mxu0 0
      %1283 = vmatprep.mubr.bf16.mxu0 0
      %1284 = vmatmul.mubr.bf16.gmra.mrb[0].mxu0 %v1247
      %v1285 = vpop.f32.mrb[0].mxu0
      %v1286 = vadd.f32 0.0, %v1285
      %v1287 = vpop.f32.mrb[0].mxu0
      %v1288 = vpop.f32.mrb[0].mxu0
      %v1289 = vpop.f32.mrb[0].mxu0
      %1290 = vdwg.mxu0
      %v1291 = vadd.f32 %v1101, %v1286
      %vm1292 = vsmask.f32 3328
      %vm1293 = vsmask.f32 7440
      %vm1294 = vmor %vm1292, %vm1293
      %v1296 = vrot.slane %v197, 4
      %v1297 = vshll.u32 %v170, 16
      %v1299 = vrot.slane %v1297, 5
      %v1300 = vor.u32 %v1296, %v1299
      %v1301 = vrot.slane %v1300, 4
      %v1303 = vshll.u32 %v171, 16
      %v1305 = vrot.slane %v1303, 5
      %v1306 = vsel %vm1294, %v1301, %v1305
      %v1308 = vrot.slane %v198, 4
      %v1309 = vshll.u32 %v172, 16
      %v1311 = vrot.slane %v1309, 5
      %v1312 = vor.u32 %v1308, %v1311
      %v1313 = vrot.slane %v1312, 4
      %v1315 = vshll.u32 %v173, 16
      %v1317 = vrot.slane %v1315, 5
      %v1318 = vsel %vm1294, %v1313, %v1317
      %v1320 = vrot.slane %v203, 4
      %v1321 = vshll.u32 %v174, 16
      %v1323 = vrot.slane %v1321, 5
      %v1324 = vor.u32 %v1320, %v1323
      %v1325 = vrot.slane %v1324, 4
      %v1327 = vshll.u32 %v175, 16
      %v1329 = vrot.slane %v1327, 5
      %v1330 = vsel %vm1294, %v1325, %v1329
      %v1332 = vrot.slane %v204, 4
      %v1333 = vshll.u32 %v176, 16
      %v1335 = vrot.slane %v1333, 5
      %v1336 = vor.u32 %v1332, %v1335
      %v1337 = vrot.slane %v1336, 4
      %v1339 = vshll.u32 %v177, 16
      %v1341 = vrot.slane %v1339, 5
      %v1342 = vsel %vm1294, %v1337, %v1341
      %v1345 = vpack.i.b16 %v1318, %v1306
      %v1346 = vshrl.u32 %v1306, 16
      %v1347 = vshrl.u32 %v1318, 16
      %v1348 = vpack.i.b16 %v1347, %v1346
      %v1351 = vpack.i.b16 %v1342, %v1330
      %v1352 = vshrl.u32 %v1330, 16
      %v1353 = vshrl.u32 %v1342, 16
      %v1354 = vpack.i.b16 %v1353, %v1352
      %v1357 = vunpack.c.l.s4 1983009808
      %v1358 = vunpack.c.0.s8 %v1357
      %v1359 = vlaneseq
      %v1360 = vshrl.u32 %v1359, 7
      %v1361 = vsub.s32 %v1358, %v1360
      %v1362 = vrot.slane %v1345, %v1361
      %v1365 = vunpack.c.l.s4 1983009808
      %v1366 = vunpack.c.0.s8 %v1365
      %v1367 = vlaneseq
      %v1368 = vshrl.u32 %v1367, 7
      %v1369 = vsub.s32 %v1366, %v1368
      %v1370 = vrot.slane %v1351, %v1369
      %v1371 = vcombine.low %v1362, %v1370
      %v1372 = vcombine.high %v1362, %v1370
      %v1374 = vunpack.c.l.s4 1934713408
      %v1375 = vunpack.c.0.s8 %v1374
      %v1376 = vlaneseq
      %v1377 = vshrl.u32 %v1376, 7
      %v1378 = vsub.s32 %v1375, %v1377
      %v1379 = vrot.slane %v1371, %v1378
      %v1381 = vunpack.c.l.s4 1934713408
      %v1382 = vunpack.c.0.s8 %v1381
      %v1383 = vlaneseq
      %v1384 = vshrl.u32 %v1383, 7
      %v1385 = vsub.s32 %v1382, %v1384
      %v1386 = vrot.slane %v1372, %v1385
      %v1387 = vcombine.high %v1379, 0
      %v1388 = vcombine.high %v1386, 0
      %v1391 = vunpack.c.l.s4 1983009808
      %v1392 = vunpack.c.0.s8 %v1391
      %v1393 = vlaneseq
      %v1394 = vshrl.u32 %v1393, 7
      %v1395 = vsub.s32 %v1392, %v1394
      %v1396 = vrot.slane %v1348, %v1395
      %v1399 = vunpack.c.l.s4 1983009808
      %v1400 = vunpack.c.0.s8 %v1399
      %v1401 = vlaneseq
      %v1402 = vshrl.u32 %v1401, 7
      %v1403 = vsub.s32 %v1400, %v1402
      %v1404 = vrot.slane %v1354, %v1403
      %v1405 = vcombine.low %v1396, %v1404
      %v1406 = vcombine.high %v1396, %v1404
      %v1408 = vunpack.c.l.s4 1934713408
      %v1409 = vunpack.c.0.s8 %v1408
      %v1410 = vlaneseq
      %v1411 = vshrl.u32 %v1410, 7
      %v1412 = vsub.s32 %v1409, %v1411
      %v1413 = vrot.slane %v1405, %v1412
      %v1415 = vunpack.c.l.s4 1934713408
      %v1416 = vunpack.c.0.s8 %v1415
      %v1417 = vlaneseq
      %v1418 = vshrl.u32 %v1417, 7
      %v1419 = vsub.s32 %v1416, %v1418
      %v1420 = vrot.slane %v1406, %v1419
      %v1421 = vcombine.high %v1413, 0
      %v1422 = vcombine.high %v1420, 0
      %v1424 = vunpack.c.l.b16 %v1413
      %v1425 = vpack.c.b16 %v1424, %v1424
      %1426 = vrot.lane.b32.xlu0 %v1425, 8
      %v1427 = vpop.permute.xlu0 %1426
      %v1429 = vunpack.c.l.b16 %v1387
      %v1430 = vpack.c.b16 %v1429, %v1429
      %1431 = vrot.lane.b32.xlu0 %v1430, 16
      %v1432 = vpop.permute.xlu0 %1431
      %v1434 = vunpack.c.l.b16 %v1421
      %v1435 = vpack.c.b16 %v1434, %v1434
      %1436 = vrot.lane.b32.xlu0 %v1435, 24
      %v1437 = vpop.permute.xlu0 %1436
      %v1439 = vunpack.c.l.b16 %v1386
      %v1440 = vpack.c.b16 %v1439, %v1439
      %1441 = vrot.lane.b32.xlu0 %v1440, 32
      %v1442 = vpop.permute.xlu0 %1441
      %v1444 = vunpack.c.l.b16 %v1420
      %v1445 = vpack.c.b16 %v1444, %v1444
      %1446 = vrot.lane.b32.xlu0 %v1445, 40
      %v1447 = vpop.permute.xlu0 %1446
      %v1449 = vunpack.c.l.b16 %v1388
      %v1450 = vpack.c.b16 %v1449, %v1449
      %1451 = vrot.lane.b32.xlu0 %v1450, 48
      %v1452 = vpop.permute.xlu0 %1451
      %v1454 = vunpack.c.l.b16 %v1422
      %v1455 = vpack.c.b16 %v1454, %v1454
      %1456 = vrot.lane.b32.xlu0 %v1455, 56
      %v1457 = vpop.permute.xlu0 %1456
      %v1460 = vsel %vm309, %v1379, %v1427
      %v1462 = vsel %vm313, %v1460, %v1432
      %v1464 = vsel %vm316, %v1462, %v1437
      %v1466 = vsel %vm319, %v1464, %v1442
      %v1468 = vsel %vm322, %v1466, %v1447
      %v1470 = vsel %vm325, %v1468, %v1452
      %v1472 = vsel %vm328, %v1470, %v1457
      %s1473 = scalar_lea.vmem %s0, 24
      %v1474 = vld [vmem:[%s1473] sm:$0xf]
      %v1476 = vsel %vm464, %v1474, 0
      %v1478 = vsel %vm468, %v1472, 0
      %1480 = vmatprep.subr.bf16.mxu0 0
      %1481 = vmatpush1.bf16.msra.mxu0 %v1478
      %1482 = vmatprep.subr.bf16.mxu0 0
      %1483 = vmatpush1.bf16.msra.mxu0 0
      %1484 = vmatprep.subr.bf16.mxu0 0
      %1485 = vmatpush1.bf16.msra.mxu0 0
      %1486 = vmatprep.subr.bf16.mxu0 0
      %1487 = vmatpush1.bf16.msra.mxu0 0
      %1488 = vmatprep.subr.bf16.mxu0 0
      %1489 = vmatpush1.bf16.msra.mxu0 0
      %1490 = vmatprep.subr.bf16.mxu0 0
      %1491 = vmatpush1.bf16.msra.mxu0 0
      %1492 = vmatprep.subr.bf16.mxu0 0
      %1493 = vmatpush1.bf16.msra.mxu0 0
      %1494 = vmatprep.subr.bf16.mxu0 0
      %1495 = vmatpush1.bf16.msra.mxu0 0
      %1496 = vmatprep.subr.bf16.mxu0 0
      %1497 = vmatpush1.bf16.msra.mxu0 0
      %1498 = vmatprep.subr.bf16.mxu0 0
      %1499 = vmatpush1.bf16.msra.mxu0 0
      %1500 = vmatprep.subr.bf16.mxu0 0
      %1501 = vmatpush1.bf16.msra.mxu0 0
      %1502 = vmatprep.subr.bf16.mxu0 0
      %1503 = vmatpush1.bf16.msra.mxu0 0
      %1504 = vmatprep.subr.bf16.mxu0 0
      %1505 = vmatpush1.bf16.msra.mxu0 0
      %1506 = vmatprep.subr.bf16.mxu0 0
      %1507 = vmatpush1.bf16.msra.mxu0 0
      %1508 = vmatprep.subr.bf16.mxu0 0
      %1509 = vmatpush1.bf16.msra.mxu0 0
      %1510 = vmatprep.subr.bf16.mxu0 0
      %1511 = vmatpush1.bf16.msra.mxu0 0
      %1512 = vmatprep.mubr.bf16.mxu0 0
      %1513 = vmatmul.mubr.bf16.gmra.mrb[0].mxu0 %v1476
      %v1514 = vpop.f32.mrb[0].mxu0
      %v1515 = vadd.f32 0.0, %v1514
      %v1516 = vpop.f32.mrb[0].mxu0
      %v1517 = vpop.f32.mrb[0].mxu0
      %v1518 = vpop.f32.mrb[0].mxu0
      %1519 = vdwg.mxu0
      %v1520 = vadd.f32 %v1291, %v1515
      %v1522 = vrot.slane %v335, 4
      %v1523 = vshll.u32 %v178, 16
      %v1525 = vrot.slane %v1523, 5
      %v1526 = vor.u32 %v1522, %v1525
      %v1527 = vrot.slane %v1526, 4
      %v1529 = vshll.u32 %v179, 16
      %v1531 = vrot.slane %v1529, 5
      %v1532 = vsel %vm1294, %v1527, %v1531
      %v1534 = vrot.slane %v336, 4
      %v1535 = vshll.u32 %v180, 16
      %v1537 = vrot.slane %v1535, 5
      %v1538 = vor.u32 %v1534, %v1537
      %v1539 = vrot.slane %v1538, 4
      %v1541 = vshll.u32 %v181, 16
      %v1543 = vrot.slane %v1541, 5
      %v1544 = vsel %vm1294, %v1539, %v1543
      %v1546 = vrot.slane %v341, 4
      %v1547 = vshll.u32 %v182, 16
      %v1549 = vrot.slane %v1547, 5
      %v1550 = vor.u32 %v1546, %v1549
      %v1551 = vrot.slane %v1550, 4
      %v1553 = vshll.u32 %v183, 16
      %v1555 = vrot.slane %v1553, 5
      %v1556 = vsel %vm1294, %v1551, %v1555
      %v1558 = vrot.slane %v342, 4
      %v1559 = vshll.u32 %v184, 16
      %v1561 = vrot.slane %v1559, 5
      %v1562 = vor.u32 %v1558, %v1561
      %v1563 = vrot.slane %v1562, 4
      %v1565 = vshll.u32 %v185, 16
      %v1567 = vrot.slane %v1565, 5
      %v1568 = vsel %vm1294, %v1563, %v1567
      %v1571 = vpack.i.b16 %v1544, %v1532
      %v1572 = vshrl.u32 %v1532, 16
      %v1573 = vshrl.u32 %v1544, 16
      %v1574 = vpack.i.b16 %v1573, %v1572
      %v1577 = vpack.i.b16 %v1568, %v1556
      %v1578 = vshrl.u32 %v1556, 16
      %v1579 = vshrl.u32 %v1568, 16
      %v1580 = vpack.i.b16 %v1579, %v1578
      %v1583 = vunpack.c.l.s4 1983009808
      %v1584 = vunpack.c.0.s8 %v1583
      %v1585 = vlaneseq
      %v1586 = vshrl.u32 %v1585, 7
      %v1587 = vsub.s32 %v1584, %v1586
      %v1588 = vrot.slane %v1571, %v1587
      %v1591 = vunpack.c.l.s4 1983009808
      %v1592 = vunpack.c.0.s8 %v1591
      %v1593 = vlaneseq
      %v1594 = vshrl.u32 %v1593, 7
      %v1595 = vsub.s32 %v1592, %v1594
      %v1596 = vrot.slane %v1577, %v1595
      %v1597 = vcombine.low %v1588, %v1596
      %v1598 = vcombine.high %v1588, %v1596
      %v1600 = vunpack.c.l.s4 1934713408
      %v1601 = vunpack.c.0.s8 %v1600
      %v1602 = vlaneseq
      %v1603 = vshrl.u32 %v1602, 7
      %v1604 = vsub.s32 %v1601, %v1603
      %v1605 = vrot.slane %v1597, %v1604
      %v1607 = vunpack.c.l.s4 1934713408
      %v1608 = vunpack.c.0.s8 %v1607
      %v1609 = vlaneseq
      %v1610 = vshrl.u32 %v1609, 7
      %v1611 = vsub.s32 %v1608, %v1610
      %v1612 = vrot.slane %v1598, %v1611
      %v1613 = vcombine.high %v1605, 0
      %v1614 = vcombine.high %v1612, 0
      %v1617 = vunpack.c.l.s4 1983009808
      %v1618 = vunpack.c.0.s8 %v1617
      %v1619 = vlaneseq
      %v1620 = vshrl.u32 %v1619, 7
      %v1621 = vsub.s32 %v1618, %v1620
      %v1622 = vrot.slane %v1574, %v1621
      %v1625 = vunpack.c.l.s4 1983009808
      %v1626 = vunpack.c.0.s8 %v1625
      %v1627 = vlaneseq
      %v1628 = vshrl.u32 %v1627, 7
      %v1629 = vsub.s32 %v1626, %v1628
      %v1630 = vrot.slane %v1580, %v1629
      %v1631 = vcombine.low %v1622, %v1630
      %v1632 = vcombine.high %v1622, %v1630
      %v1634 = vunpack.c.l.s4 1934713408
      %v1635 = vunpack.c.0.s8 %v1634
      %v1636 = vlaneseq
      %v1637 = vshrl.u32 %v1636, 7
      %v1638 = vsub.s32 %v1635, %v1637
      %v1639 = vrot.slane %v1631, %v1638
      %v1641 = vunpack.c.l.s4 1934713408
      %v1642 = vunpack.c.0.s8 %v1641
      %v1643 = vlaneseq
      %v1644 = vshrl.u32 %v1643, 7
      %v1645 = vsub.s32 %v1642, %v1644
      %v1646 = vrot.slane %v1632, %v1645
      %v1647 = vcombine.high %v1639, 0
      %v1648 = vcombine.high %v1646, 0
      %v1650 = vunpack.c.l.b16 %v1639
      %v1651 = vpack.c.b16 %v1650, %v1650
      %1652 = vrot.lane.b32.xlu0 %v1651, 8
      %v1653 = vpop.permute.xlu0 %1652
      %v1655 = vunpack.c.l.b16 %v1613
      %v1656 = vpack.c.b16 %v1655, %v1655
      %1657 = vrot.lane.b32.xlu0 %v1656, 16
      %v1658 = vpop.permute.xlu0 %1657
      %v1660 = vunpack.c.l.b16 %v1647
      %v1661 = vpack.c.b16 %v1660, %v1660
      %1662 = vrot.lane.b32.xlu0 %v1661, 24
      %v1663 = vpop.permute.xlu0 %1662
      %v1665 = vunpack.c.l.b16 %v1612
      %v1666 = vpack.c.b16 %v1665, %v1665
      %1667 = vrot.lane.b32.xlu0 %v1666, 32
      %v1668 = vpop.permute.xlu0 %1667
      %v1670 = vunpack.c.l.b16 %v1646
      %v1671 = vpack.c.b16 %v1670, %v1670
      %1672 = vrot.lane.b32.xlu0 %v1671, 40
      %v1673 = vpop.permute.xlu0 %1672
      %v1675 = vunpack.c.l.b16 %v1614
      %v1676 = vpack.c.b16 %v1675, %v1675
      %1677 = vrot.lane.b32.xlu0 %v1676, 48
      %v1678 = vpop.permute.xlu0 %1677
      %v1680 = vunpack.c.l.b16 %v1648
      %v1681 = vpack.c.b16 %v1680, %v1680
      %1682 = vrot.lane.b32.xlu0 %v1681, 56
      %v1683 = vpop.permute.xlu0 %1682
      %v1686 = vsel %vm309, %v1605, %v1653
      %v1688 = vsel %vm313, %v1686, %v1658
      %v1690 = vsel %vm316, %v1688, %v1663
      %v1692 = vsel %vm319, %v1690, %v1668
      %v1694 = vsel %vm322, %v1692, %v1673
      %v1696 = vsel %vm325, %v1694, %v1678
      %v1698 = vsel %vm328, %v1696, %v1683
      %s1699 = scalar_lea.vmem %s0, 28
      %v1700 = vld [vmem:[%s1699] sm:$0xf]
      %v1702 = vsel %vm464, %v1700, 0
      %v1704 = vsel %vm468, %v1698, 0
      %1706 = vmatprep.subr.bf16.mxu0 0
      %1707 = vmatpush1.bf16.msra.mxu0 %v1704
      %1708 = vmatprep.subr.bf16.mxu0 0
      %1709 = vmatpush1.bf16.msra.mxu0 0
      %1710 = vmatprep.subr.bf16.mxu0 0
      %1711 = vmatpush1.bf16.msra.mxu0 0
      %1712 = vmatprep.subr.bf16.mxu0 0
      %1713 = vmatpush1.bf16.msra.mxu0 0
      %1714 = vmatprep.subr.bf16.mxu0 0
      %1715 = vmatpush1.bf16.msra.mxu0 0
      %1716 = vmatprep.subr.bf16.mxu0 0
      %1717 = vmatpush1.bf16.msra.mxu0 0
      %1718 = vmatprep.subr.bf16.mxu0 0
      %1719 = vmatpush1.bf16.msra.mxu0 0
      %1720 = vmatprep.subr.bf16.mxu0 0
      %1721 = vmatpush1.bf16.msra.mxu0 0
      %1722 = vmatprep.subr.bf16.mxu0 0
      %1723 = vmatpush1.bf16.msra.mxu0 0
      %1724 = vmatprep.subr.bf16.mxu0 0
      %1725 = vmatpush1.bf16.msra.mxu0 0
      %1726 = vmatprep.subr.bf16.mxu0 0
      %1727 = vmatpush1.bf16.msra.mxu0 0
      %1728 = vmatprep.subr.bf16.mxu0 0
      %1729 = vmatpush1.bf16.msra.mxu0 0
      %1730 = vmatprep.subr.bf16.mxu0 0
      %1731 = vmatpush1.bf16.msra.mxu0 0
      %1732 = vmatprep.subr.bf16.mxu0 0
      %1733 = vmatpush1.bf16.msra.mxu0 0
      %1734 = vmatprep.subr.bf16.mxu0 0
      %1735 = vmatpush1.bf16.msra.mxu0 0
      %1736 = vmatprep.subr.bf16.mxu0 0
      %1737 = vmatpush1.bf16.msra.mxu0 0
      %1738 = vmatprep.mubr.bf16.mxu0 0
      %1739 = vmatmul.mubr.bf16.gmra.mrb[0].mxu0 %v1702
      %v1740 = vpop.f32.mrb[0].mxu0
      %v1741 = vadd.f32 0.0, %v1740
      %v1742 = vpop.f32.mrb[0].mxu0
      %v1743 = vpop.f32.mrb[0].mxu0
      %v1744 = vpop.f32.mrb[0].mxu0
      %1745 = vdwg.mxu0
      %v1746 = vadd.f32 %v1520, %v1741
      %1747 = vrot.lane.b32.xlu0 %v1306, 127
      %v1748 = vpop.permute.xlu0 %1747
      %1749 = vrot.lane.b32.xlu0 %v1318, 127
      %v1750 = vpop.permute.xlu0 %1749
      %1751 = vrot.lane.b32.xlu0 %v1330, 127
      %v1752 = vpop.permute.xlu0 %1751
      %1753 = vrot.lane.b32.xlu0 %v1342, 127
      %v1754 = vpop.permute.xlu0 %1753
      %v1757 = vpack.i.b16 %v1750, %v1748
      %v1758 = vshrl.u32 %v1748, 16
      %v1759 = vshrl.u32 %v1750, 16
      %v1760 = vpack.i.b16 %v1759, %v1758
      %v1763 = vpack.i.b16 %v1754, %v1752
      %v1764 = vshrl.u32 %v1752, 16
      %v1765 = vshrl.u32 %v1754, 16
      %v1766 = vpack.i.b16 %v1765, %v1764
      %v1769 = vunpack.c.l.s4 1983009808
      %v1770 = vunpack.c.0.s8 %v1769
      %v1771 = vlaneseq
      %v1772 = vshrl.u32 %v1771, 7
      %v1773 = vsub.s32 %v1770, %v1772
      %v1774 = vrot.slane %v1757, %v1773
      %v1777 = vunpack.c.l.s4 1983009808
      %v1778 = vunpack.c.0.s8 %v1777
      %v1779 = vlaneseq
      %v1780 = vshrl.u32 %v1779, 7
      %v1781 = vsub.s32 %v1778, %v1780
      %v1782 = vrot.slane %v1763, %v1781
      %v1783 = vcombine.low %v1774, %v1782
      %v1784 = vcombine.high %v1774, %v1782
      %v1786 = vunpack.c.l.s4 1934713408
      %v1787 = vunpack.c.0.s8 %v1786
      %v1788 = vlaneseq
      %v1789 = vshrl.u32 %v1788, 7
      %v1790 = vsub.s32 %v1787, %v1789
      %v1791 = vrot.slane %v1783, %v1790
      %v1793 = vunpack.c.l.s4 1934713408
      %v1794 = vunpack.c.0.s8 %v1793
      %v1795 = vlaneseq
      %v1796 = vshrl.u32 %v1795, 7
      %v1797 = vsub.s32 %v1794, %v1796
      %v1798 = vrot.slane %v1784, %v1797
      %v1799 = vcombine.high %v1791, 0
      %v1800 = vcombine.high %v1798, 0
      %v1803 = vunpack.c.l.s4 1983009808
      %v1804 = vunpack.c.0.s8 %v1803
      %v1805 = vlaneseq
      %v1806 = vshrl.u32 %v1805, 7
      %v1807 = vsub.s32 %v1804, %v1806
      %v1808 = vrot.slane %v1760, %v1807
      %v1811 = vunpack.c.l.s4 1983009808
      %v1812 = vunpack.c.0.s8 %v1811
      %v1813 = vlaneseq
      %v1814 = vshrl.u32 %v1813, 7
      %v1815 = vsub.s32 %v1812, %v1814
      %v1816 = vrot.slane %v1766, %v1815
      %v1817 = vcombine.low %v1808, %v1816
      %v1818 = vcombine.high %v1808, %v1816
      %v1820 = vunpack.c.l.s4 1934713408
      %v1821 = vunpack.c.0.s8 %v1820
      %v1822 = vlaneseq
      %v1823 = vshrl.u32 %v1822, 7
      %v1824 = vsub.s32 %v1821, %v1823
      %v1825 = vrot.slane %v1817, %v1824
      %v1827 = vunpack.c.l.s4 1934713408
      %v1828 = vunpack.c.0.s8 %v1827
      %v1829 = vlaneseq
      %v1830 = vshrl.u32 %v1829, 7
      %v1831 = vsub.s32 %v1828, %v1830
      %v1832 = vrot.slane %v1818, %v1831
      %v1833 = vcombine.high %v1825, 0
      %v1834 = vcombine.high %v1832, 0
      %v1836 = vunpack.c.l.b16 %v1825
      %v1837 = vpack.c.b16 %v1836, %v1836
      %1838 = vrot.lane.b32.xlu0 %v1837, 8
      %v1839 = vpop.permute.xlu0 %1838
      %v1841 = vunpack.c.l.b16 %v1799
      %v1842 = vpack.c.b16 %v1841, %v1841
      %1843 = vrot.lane.b32.xlu0 %v1842, 16
      %v1844 = vpop.permute.xlu0 %1843
      %v1846 = vunpack.c.l.b16 %v1833
      %v1847 = vpack.c.b16 %v1846, %v1846
      %1848 = vrot.lane.b32.xlu0 %v1847, 24
      %v1849 = vpop.permute.xlu0 %1848
      %v1851 = vunpack.c.l.b16 %v1798
      %v1852 = vpack.c.b16 %v1851, %v1851
      %1853 = vrot.lane.b32.xlu0 %v1852, 32
      %v1854 = vpop.permute.xlu0 %1853
      %v1856 = vunpack.c.l.b16 %v1832
      %v1857 = vpack.c.b16 %v1856, %v1856
      %1858 = vrot.lane.b32.xlu0 %v1857, 40
      %v1859 = vpop.permute.xlu0 %1858
      %v1861 = vunpack.c.l.b16 %v1800
      %v1862 = vpack.c.b16 %v1861, %v1861
      %1863 = vrot.lane.b32.xlu0 %v1862, 48
      %v1864 = vpop.permute.xlu0 %1863
      %v1866 = vunpack.c.l.b16 %v1834
      %v1867 = vpack.c.b16 %v1866, %v1866
      %1868 = vrot.lane.b32.xlu0 %v1867, 56
      %v1869 = vpop.permute.xlu0 %1868
      %v1872 = vsel %vm309, %v1791, %v1839
      %v1874 = vsel %vm313, %v1872, %v1844
      %v1876 = vsel %vm316, %v1874, %v1849
      %v1878 = vsel %vm319, %v1876, %v1854
      %v1880 = vsel %vm322, %v1878, %v1859
      %v1882 = vsel %vm325, %v1880, %v1864
      %v1884 = vsel %vm328, %v1882, %v1869
      %s1885 = scalar_lea.vmem %s0, 32
      %v1886 = vld [vmem:[%s1885] sm:$0xf]
      %v1888 = vsel %vm464, %v1886, 0
      %v1890 = vsel %vm468, %v1884, 0
      %1892 = vmatprep.subr.bf16.mxu0 0
      %1893 = vmatpush1.bf16.msra.mxu0 %v1890
      %1894 = vmatprep.subr.bf16.mxu0 0
      %1895 = vmatpush1.bf16.msra.mxu0 0
      %1896 = vmatprep.subr.bf16.mxu0 0
      %1897 = vmatpush1.bf16.msra.mxu0 0
      %1898 = vmatprep.subr.bf16.mxu0 0
      %1899 = vmatpush1.bf16.msra.mxu0 0
      %1900 = vmatprep.subr.bf16.mxu0 0
      %1901 = vmatpush1.bf16.msra.mxu0 0
      %1902 = vmatprep.subr.bf16.mxu0 0
      %1903 = vmatpush1.bf16.msra.mxu0 0
      %1904 = vmatprep.subr.bf16.mxu0 0
      %1905 = vmatpush1.bf16.msra.mxu0 0
      %1906 = vmatprep.subr.bf16.mxu0 0
      %1907 = vmatpush1.bf16.msra.mxu0 0
      %1908 = vmatprep.subr.bf16.mxu0 0
      %1909 = vmatpush1.bf16.msra.mxu0 0
      %1910 = vmatprep.subr.bf16.mxu0 0
      %1911 = vmatpush1.bf16.msra.mxu0 0
      %1912 = vmatprep.subr.bf16.mxu0 0
      %1913 = vmatpush1.bf16.msra.mxu0 0
      %1914 = vmatprep.subr.bf16.mxu0 0
      %1915 = vmatpush1.bf16.msra.mxu0 0
      %1916 = vmatprep.subr.bf16.mxu0 0
      %1917 = vmatpush1.bf16.msra.mxu0 0
      %1918 = vmatprep.subr.bf16.mxu0 0
      %1919 = vmatpush1.bf16.msra.mxu0 0
      %1920 = vmatprep.subr.bf16.mxu0 0
      %1921 = vmatpush1.bf16.msra.mxu0 0
      %1922 = vmatprep.subr.bf16.mxu0 0
      %1923 = vmatpush1.bf16.msra.mxu0 0
      %1924 = vmatprep.mubr.bf16.mxu0 0
      %1925 = vmatmul.mubr.bf16.gmra.mrb[0].mxu0 %v1888
      %v1926 = vpop.f32.mrb[0].mxu0
      %v1927 = vadd.f32 0.0, %v1926
      %v1928 = vpop.f32.mrb[0].mxu0
      %v1929 = vpop.f32.mrb[0].mxu0
      %v1930 = vpop.f32.mrb[0].mxu0
      %1931 = vdwg.mxu0
      %v1932 = vadd.f32 %v1746, %v1927
      %v1933 = vld [vmem:[%s1] sm:$0xff]
      %1935 = vset.pattern.permute.xlu0 0
      %1936 = vperm.xlu0 %1935, %v1933
      %v1937 = vpop.permute.xlu0 %1936
      %v1939 = vadd.f32 %v1932, %v1937
      %vm1940 = vcmask 523264
      %1941 = vst.msk [vmem:[%s168] sm:$0xff] %vm1940, %v1939
      %p1942 = scmp.lt.s32.totalorder %s14, 1
      %s1943 = scalar_select %p1942, %s14, 1
      %s1944 = smul.addr %s1943, 8
      %s1945 = scalar_lea.vmem %s3, %s1944
      // Predicated region
      $region33: #{_conv2d_pallas_impl.1} parent=31 // pred_check
        %p1946 = pneg %p100
      $region34: #{_conv2d_pallas_impl.1} parent=31 // pred_check_branch
        %1948 = sbr.rel (%p1946) target = $region36
      $region35: #{_conv2d_pallas_impl.1} parent=31 // pred_region
        _
      $region36: #{_conv2d_pallas_impl.1} parent=31 // pred_fallthru
        _
    $region32: #{_conv2d_pallas_impl.1} parent=5 // pred_fallthru
      _
    %p1949 = scmp.le.s32.totalorder 2, %s9
    // Predicated region
    $region37: #{_conv2d_pallas_impl.1} parent=5 // pred_check
      %p1950 = pneg %p1949
    $region38: #{_conv2d_pallas_impl.1} parent=5 // pred_check_branch
      %1952 = sbr.rel (%p1950) target = $region40
    $region39: #{_conv2d_pallas_impl.1} parent=5 // pred_region
      %s1953 = ssub.s32 %s9, 2
      // Predicated region
      $region41: #{_conv2d_pallas_impl.1} parent=39 // pred_check
        %p1954 = pneg %p106
      $region42: #{_conv2d_pallas_impl.1} parent=39 // pred_check_branch
        %1956 = sbr.rel (%p1954) target = $region44
      $region43: #{_conv2d_pallas_impl.1} parent=39 // pred_region
        %p1957 = scmp.lt.s32.totalorder %s15, 1
        %s1958 = scalar_select %p1957, %s15, 1
        %s1959 = smul.addr %s1958, 8
        %s1960 = scalar_lea.vmem %s3, %s1959
      $region44: #{_conv2d_pallas_impl.1} parent=39 // pred_fallthru
        _
    $region40: #{_conv2d_pallas_impl.1} parent=5 // pred_fallthru
      _
  $region6: #{_conv2d_pallas_impl.1} parent=0 // loop_footer
    %s13 = sadd.s32 1, %s9
  $region7: #{_conv2d_pallas_impl.1} parent=0 // loop_footer_branch
    %8 = sbr.rel target = $region3
  $region8: #{_conv2d_pallas_impl.1} parent=0 // loop_exit
    _

</llo_original>
